<compile_context>
chip_gen: v5e
topology: v5e:2x2
jax: 0.10.0
libtpu: 0.0.40
codegen_flags: <defaults>
</compile_context>

<pallas_src>
import functools

import jax
import jax.numpy as jnp
from jax.experimental import pallas as pl
from jax.experimental.pallas import tpu as pltpu

EPS = 1e-5                           # nn.BatchNorm2d default eps
LANE = 128                           # TPU lane width
VMEM_LIMIT = 48 * 1024 * 1024        # safe on v7x's 64 MiB per-TC VMEM, above scoped defaults
TILE_VMEM_BUDGET = 8 * 1024 * 1024   # working-set target used to size row tiles


def _round_up(x, m):
    return (x + m - 1) // m * m


# ---------------------------------------------------------------------------
# Pallas kernels
# ---------------------------------------------------------------------------
def _matmul_kernel(p_ref, w_ref, o_ref):
    # Stage 0: residual conv as a plain row-tiled matmul. bf16 operands, f32 MXU accumulation,
    # bf16 writeback (review: bf16 conv intermediates).
    o_ref[...] = jnp.dot(p_ref[...], w_ref[...],
                         preferred_element_type=jnp.float32).astype(o_ref.dtype)


def _conv3x3_stats_kernel(xm_ref, ha_ref, hb_ref, w_ref, y_ref, sum_ref, ssq_ref):
    # Implicit-GEMM 3x3 stride-1 conv over one (TH rows) x (full width) tile:
    #   inputs : main tile (1, TH, Wp, Cin) + two single-row halos (spatially pre-padded input),
    #            weights (9, Cin, Cp) resident in VMEM.
    #   outputs: raw conv tile (bf16) + per-tile per-channel sum / sum-of-squares (f32, taken
    #            from the f32 accumulator BEFORE the bf16 cast).
    th = xm_ref.shape[1]
    wp = xm_ref.shape[2]
    cin = xm_ref.shape[3]
    wo = wp - 2
    cp = y_ref.shape[3]

    # (TH+2, Wp, Cin) working tile in VMEM (vreg copies only, no HBM traffic).
    x = jnp.concatenate([xm_ref[0], ha_ref[0], hb_ref[0]], axis=0)

    acc = jnp.zeros((th * wo, cp), jnp.float32)
    for kh in range(3):
        for kw in range(3):
            xs = x[kh:kh + th, kw:kw + wo, :].reshape(th * wo, cin)
            acc += jnp.dot(xs, w_ref[kh * 3 + kw], preferred_element_type=jnp.float32)

    s = jnp.sum(acc, axis=0).reshape(1, 1, 1, cp)
    q = jnp.sum(acc * acc, axis=0).reshape(1, 1, 1, cp)
    sum_ref[...] = jnp.broadcast_to(s, sum_ref.shape)   # row 0 is read back; rest is filler
    ssq_ref[...] = jnp.broadcast_to(q, ssq_ref.shape)
    y_ref[...] = acc.reshape(1, th, wo, cp).astype(y_ref.dtype)


def _bn_relu_kernel(y_ref, scale_ref, shift_ref, o_ref):
    # BN pass B: upcast bf16 -> f32, single FMA per element + ReLU (f32 VPU math, v5e-safe).
    y = y_ref[...].astype(jnp.float32)
    o_ref[...] = jnp.maximum(y * scale_ref[...] + shift_ref[...], 0.0).astype(o_ref.dtype)


def _bn_add_relu_kernel(y_ref, res_ref, scale_ref, shift_ref, o_ref):
    # Stage-2 pass B: BN affine + residual add + final ReLU.
    y = y_ref[...].astype(jnp.float32)
    r = res_ref[...].astype(jnp.float32)
    o_ref[...] = jnp.maximum(r + y * scale_ref[...] + shift_ref[...], 0.0).astype(o_ref.dtype)


# ---------------------------------------------------------------------------
# pallas_call wrappers
# ---------------------------------------------------------------------------
def _pick_divisor_tile(m, max_rows=1024):
    # Largest multiple-of-8 divisor of m not exceeding max_rows (0 -> caller pads).
    cap = min(m, max_rows)
    for t in range(cap - cap % 8, 7, -8):
        if m % t == 0:
            return t
    return 0


def _pick_row_tile(ho, wp, cin_p, cout_p, budget=TILE_VMEM_BUDGET, max_rows=256):
    # Largest divisor of Ho whose double-buffered bf16 input / output rows + f32 acc fit budget.
    per_row = 2 * (wp * cin_p * 2) + 2 * (wp * cout_p * 2) + (wp * cout_p * 4)
    cap = max(1, min(max_rows, budget // max(per_row, 1)))
    for th in range(min(ho, cap), 0, -1):
        if ho % th == 0:
            return th
    return 1


def _conv_s2_matmul(patches, w_mat, cp):
    """Stage-0 residual conv: row-tiled (M, K) @ (K, Cp) matmul; K left unpadded."""
    M, K = patches.shape
    tm = _pick_divisor_tile(M)
    if tm == 0:                                  # rare fallback: pad rows to a multiple of 8
        tm = min(1024, _round_up(M, 8))
    Mp = _round_up(M, tm)
    if Mp != M:
        patches = jnp.pad(patches, ((0, Mp - M), (0, 0)))
    out = pl.pallas_call(
        _matmul_kernel,
        out_shape=jax.ShapeDtypeStruct((Mp, cp), jnp.bfloat16),
        grid=(Mp // tm,),
        in_specs=[pl.BlockSpec((tm, K), lambda i: (i, 0)),
                  pl.BlockSpec((K, cp), lambda i: (0, 0))],      # weight resident in VMEM
        out_specs=pl.BlockSpec((tm, cp), lambda i: (i, 0)),
        compiler_params=pltpu.CompilerParams(
            dimension_semantics=("parallel",), vmem_limit_bytes=VMEM_LIMIT),
    )(patches, w_mat)
    return out[:M] if Mp != M else out


def _conv3x3_s1_stats(x_pad, w9, th):
    """Implicit-GEMM 3x3/stride-1 conv + per-tile BN partial stats.

    x_pad: (N, Ho+2, Wo+2, Cin) bf16 (spatially zero-padded), w9: (9, Cin, Cp) bf16.
    Returns y (N, Ho, Wo, Cp) bf16 and per-tile sum / sumsq (N, nT, Cp) f32.
    """
    N, Hp, Wp, Cin = x_pad.shape
    Ho, Wo = Hp - 2, Wp - 2
    Cp = w9.shape[2]
    assert Ho % th == 0
    nT = Ho // th

    main_spec = pl.BlockSpec((1, th, Wp, Cin), lambda n, t: (n, t, 0, 0))
    ha_spec = pl.BlockSpec((1, 1, Wp, Cin), lambda n, t: (n, t * th + th, 0, 0))
    hb_spec = pl.BlockSpec((1, 1, Wp, Cin), lambda n, t: (n, t * th + th + 1, 0, 0))
    w_spec = pl.BlockSpec((9, Cin, Cp), lambda n, t: (0, 0, 0))   # resident weight
    y_spec = pl.BlockSpec((1, th, Wo, Cp), lambda n, t: (n, t, 0, 0))
    st_spec = pl.BlockSpec((1, 1, 8, Cp), lambda n, t: (n, t, 0, 0))

    y, s, q = pl.pallas_call(
        _conv3x3_stats_kernel,
        out_shape=(jax.ShapeDtypeStruct((N, Ho, Wo, Cp), jnp.bfloat16),
                   jax.ShapeDtypeStruct((N, nT, 8, Cp), jnp.float32),
                   jax.ShapeDtypeStruct((N, nT, 8, Cp), jnp.float32)),
        grid=(N, nT),
        in_specs=[main_spec, ha_spec, hb_spec, w_spec],
        out_specs=(y_spec, st_spec, st_spec),
        compiler_params=pltpu.CompilerParams(
            dimension_semantics=("parallel", "parallel"),   # per-tile stats -> no "arbitrary" axis
            vmem_limit_bytes=VMEM_LIMIT),
    )(x_pad, x_pad, x_pad, w9)
    return y, s[:, :, 0, :], q[:, :, 0, :]


def _bn_scale_shift(s, q, count, gamma, beta, cp):
    # Reduce the tiny per-tile partial sums in plain JAX, then fold BN into one scale/shift.
    s = jnp.sum(s, axis=(0, 1))
    q = jnp.sum(q, axis=(0, 1))
    mean = s / count
    var = jnp.maximum(q / count - mean * mean, 0.0)
    g = jnp.pad(gamma.astype(jnp.float32), (0, cp - gamma.shape[0]))
    b = jnp.pad(beta.astype(jnp.float32), (0, cp - beta.shape[0]))
    scale = g * jax.lax.rsqrt(var + EPS)
    shift = b - mean * scale
    return scale.reshape(1, 1, 1, cp), shift.reshape(1, 1, 1, cp)


def _bn_apply(y, scale, shift, th, res=None, out_dtype=jnp.bfloat16):
    N, Ho, Wo, Cp = y.shape
    assert Ho % th == 0
    nT = Ho // th
    tile = pl.BlockSpec((1, th, Wo, Cp), lambda n, t: (n, t, 0, 0))
    vec = pl.BlockSpec((1, 1, 1, Cp), lambda n, t: (0, 0, 0, 0))
    if res is None:
        kernel, args, in_specs = _bn_relu_kernel, (y, scale, shift), [tile, vec, vec]
    else:
        kernel, args, in_specs = (_bn_add_relu_kernel, (y, res, scale, shift),
                                  [tile, tile, vec, vec])
    return pl.pallas_call(
        kernel,
        out_shape=jax.ShapeDtypeStruct((N, Ho, Wo, Cp), out_dtype),
        grid=(N, nT),
        in_specs=in_specs,
        out_specs=tile,
        compiler_params=pltpu.CompilerParams(
            dimension_semantics=("parallel", "parallel"), vmem_limit_bytes=VMEM_LIMIT),
    )(*args)


# ---------------------------------------------------------------------------
# Plain-JAX glue: stage-0 im2col (bf16-born) + weight layout conversion
# ---------------------------------------------------------------------------
def _im2col_s2(x_nhwc, ksize=3, stride=2, pad=1):
    N, H, W, C = x_nhwc.shape
    xp = jnp.pad(x_nhwc, ((0, 0), (pad, pad), (pad, pad), (0, 0)))
    Ho = (H + 2 * pad - ksize) // stride + 1
    Wo = (W + 2 * pad - ksize) // stride + 1
    cols = []
    for kh in range(ksize):
        for kw in range(ksize):
            cols.append(xp[:, kh:kh + stride * Ho:stride, kw:kw + stride * Wo:stride, :])
    patches = jnp.concatenate(cols, axis=-1)                 # (N, Ho, Wo, 9*C), bf16-born
    return patches.reshape(N * Ho * Wo, ksize * ksize * C), (N, Ho, Wo)


def _w_oihw_to_mat(w, cp):
    # (Cout, Cin, 3, 3) -> (9*Cin, Cp); row order (kh, kw, cin) matches _im2col_s2.
    cout, cin, kh, kw = w.shape
    wm = jnp.transpose(w, (2, 3, 1, 0)).reshape(kh * kw * cin, cout)
    if cp != cout:
        wm = jnp.pad(wm, ((0, 0), (0, cp - cout)))
    return wm.astype(jnp.bfloat16)


def _w_oihw_to_9cc(w, cp):
    # (Cout, Cin, 3, 3) -> (9, Cp, Cp), entry [kh*3+kw] = W[:, :, kh, kw].T (zero-padded).
    cout, cin, _, _ = w.shape
    w9 = jnp.transpose(w, (2, 3, 1, 0)).reshape(9, cin, cout)
    w9 = jnp.pad(w9, ((0, 0), (0, cp - cin), (0, cp - cout)))
    return w9.astype(jnp.bfloat16)


# ---------------------------------------------------------------------------
# ResBlock forward (scale='down', BatchNorm2d with batch statistics)
# ---------------------------------------------------------------------------
def resblock_forward(x_nchw, params, max_tile_rows=256):
    out_nc = params["w_scale"].shape[0]
    cp = _round_up(out_nc, LANE)

    x = jnp.transpose(x_nchw, (0, 2, 3, 1)).astype(jnp.bfloat16)       # NCHW -> NHWC, born bf16

    # self.scale: Conv2d(in_nc, out_nc, 3, stride=2, padding=1, bias=False)
    p0, (N, Ho, Wo) = _im2col_s2(x)
    M = N * Ho * Wo
    res2d = _conv_s2_matmul(p0, _w_oihw_to_mat(params["w_scale"], cp), cp)   # (M, cp) bf16
    res = res2d.reshape(N, Ho, Wo, cp)

    th = _pick_row_tile(Ho, Wo + 2, cp, cp, max_rows=max_tile_rows)

    # block[0:3]: Conv3x3(s1) -> BatchNorm (batch stats) -> ReLU   (implicit GEMM + fused stats)
    res_pad = jnp.pad(res, ((0, 0), (1, 1), (1, 1), (0, 0)))
    y1, s1, q1 = _conv3x3_s1_stats(res_pad, _w_oihw_to_9cc(params["w1"], cp), th)
    sc1, sh1 = _bn_scale_shift(s1, q1, float(M), params["gamma1"], params["beta1"], cp)
    y1n = _bn_apply(y1, sc1, sh1, th)                                   # bf16, feeds conv2

    # block[3:5] + residual add + final ReLU
    y1p = jnp.pad(y1n, ((0, 0), (1, 1), (1, 1), (0, 0)))
    y2, s2, q2 = _conv3x3_s1_stats(y1p, _w_oihw_to_9cc(params["w2"], cp), th)
    sc2, sh2 = _bn_scale_shift(s2, q2, float(M), params["gamma2"], params["beta2"], cp)
    out = _bn_apply(y2, sc2, sh2, th, res=res, out_dtype=jnp.float32)   # (N,Ho,Wo,cp) f32

    out = out[..., :out_nc]
    return jnp.transpose(out, (0, 3, 1, 2))                            # NHWC -> NCHW


# ---------------------------------------------------------------------------
# Reference (bf16 conv operands / f32 accumulation, f32 intermediates otherwise)
# ---------------------------------------------------------------------------
def _conv_ref(x_nhwc, w_oihw, stride):
    return jax.lax.conv_general_dilated(
        x_nhwc.astype(jnp.bfloat16),
        jnp.transpose(w_oihw, (2, 3, 1, 0)).astype(jnp.bfloat16),
        window_strides=(stride, stride), padding=((1, 1), (1, 1)),
        dimension_numbers=("NHWC", "HWIO", "NHWC"),
        preferred_element_type=jnp.float32)


def _bn_ref(y, gamma, beta):
    mean = jnp.mean(y, axis=(0, 1, 2), keepdims=True)
    var = jnp.mean(jnp.square(y - mean), axis=(0, 1, 2), keepdims=True)
    return (y - mean) * jax.lax.rsqrt(var + EPS) * gamma + beta


def resblock_ref(x_nchw, params):
    x = jnp.transpose(x_nchw, (0, 2, 3, 1)).astype(jnp.float32)
    res = _conv_ref(x, params["w_scale"], 2)
    y = jnp.maximum(_bn_ref(_conv_ref(res, params["w1"], 1),
                            params["gamma1"], params["beta1"]), 0.0)
    y = _bn_ref(_conv_ref(y, params["w2"], 1), params["gamma2"], params["beta2"])
    out = jnp.maximum(res + y, 0.0)
    return jnp.transpose(out, (0, 3, 1, 2))


# ---------------------------------------------------------------------------
if __name__ == "__main__":
    N, in_nc, out_nc, H, W = 2, 4, 8, 16, 16

    key = jax.random.PRNGKey(0)
    kx, ks, k1, k2, kg1, kb1, kg2, kb2 = jax.random.split(key, 8)

    x = jax.random.normal(kx, (N, in_nc, H, W), dtype=jnp.float32)
    params = {
        "w_scale": 0.1 * jax.random.normal(ks, (out_nc, in_nc, 3, 3), dtype=jnp.float32),
        "w1":      0.1 * jax.random.normal(k1, (out_nc, out_nc, 3, 3), dtype=jnp.float32),
        "w2":      0.1 * jax.random.normal(k2, (out_nc, out_nc, 3, 3), dtype=jnp.float32),
        "gamma1":  1.0 + 0.1 * jax.random.normal(kg1, (out_nc,), dtype=jnp.float32),
        "beta1":   0.1 * jax.random.normal(kb1, (out_nc,), dtype=jnp.float32),
        "gamma2":  1.0 + 0.1 * jax.random.normal(kg2, (out_nc,), dtype=jnp.float32),
        "beta2":   0.1 * jax.random.normal(kb2, (out_nc,), dtype=jnp.float32),
    }

    # max_tile_rows=4 -> 2 row tiles per image: exercises halo blocks and the cross-tile
    # partial-stats reduction.
    fwd = jax.jit(functools.partial(resblock_forward, max_tile_rows=4))
    out = jax.block_until_ready(fwd(x, params))
    ref = jax.block_until_ready(resblock_ref(x, params))

    assert out.shape == (N, out_nc, H // 2, W // 2), out.shape
    # bf16 storage of the conv intermediates bounds the deviation vs the f32-intermediate
    # reference to a few 1e-2 max-abs / ~1e-2 relative.
    err_max = float(jnp.max(jnp.abs(out - ref)))
    err_rel = float(jnp.linalg.norm(out - ref) / (jnp.linalg.norm(ref) + 1e-8))
    assert err_max < 1e-1 and err_rel < 3e-2, (err_max, err_rel)
    print("KERNEL_OK")
</pallas_src>

<mosaic_0001>
module attributes {stable_mosaic.version = 11 : i64} {
  func.func @_matmul_kernel(%arg0: i32, %arg1: memref<128x36xbf16, #tpu.memory_space<vmem>>, %arg2: memref<36x128xbf16, #tpu.memory_space<vmem>>, %arg3: memref<128x128xbf16, #tpu.memory_space<vmem>>) attributes {dimension_semantics = [#tpu.dimension_semantics<parallel>], iteration_bounds = array<i64: 1>, scalar_prefetch = 0 : i64, scratch_operands = 0 : i64, tpu.core_type = #tpu.core_type<tc>, window_params = [{transform_indices = @transform_0, window_bounds = array<i64: 128, 36>}, {pipeline_mode = #tpu.pipeline_mode<synchronous>, transform_indices = @transform_1, window_bounds = array<i64: 36, 128>}, {transform_indices = @transform_2, window_bounds = array<i64: 128, 128>}]} {
    %c0 = arith.constant 0 : index
    %c0_0 = arith.constant 0 : index
    %0 = vector.load %arg1[%c0, %c0_0] : memref<128x36xbf16, #tpu.memory_space<vmem>>, vector<128x36xbf16>
    %c0_1 = arith.constant 0 : index
    %c0_2 = arith.constant 0 : index
    %1 = vector.load %arg2[%c0_1, %c0_2] : memref<36x128xbf16, #tpu.memory_space<vmem>>, vector<36x128xbf16>
    %cst = arith.constant dense<0.000000e+00> : vector<128x128xf32>
    %2 = tpu.matmul %0, %1, %cst {dimension_numbers = #tpu.dot_dimension_numbers<[1], [0], [0], [1], [0, 0, 1, 1], [], []>} : vector<128x36xbf16>, vector<36x128xbf16>, vector<128x128xf32> -> vector<128x128xf32>
    %3 = arith.truncf %2 : vector<128x128xf32> to vector<128x128xbf16>
    %c0_3 = arith.constant 0 : index
    %c0_4 = arith.constant 0 : index
    %4 = vector.load %arg3[%c0_3, %c0_4] : memref<128x128xbf16, #tpu.memory_space<vmem>>, vector<128x128xbf16>
    tpu.vector_store %arg3[%c0_3, %c0_4], %3 {strides = array<i32>} : memref<128x128xbf16, #tpu.memory_space<vmem>>, vector<128x128xbf16>,
    return
  }
  func.func @transform_0(%arg0: i32) -> (i32, i32) {
    %c0_i32 = arith.constant 0 : i32
    %c0_i32_0 = arith.constant 0 : i32
    return %arg0, %c0_i32 : i32, i32
  }
  func.func @transform_1(%arg0: i32) -> (i32, i32) {
    %c0_i32 = arith.constant 0 : i32
    %c0_i32_0 = arith.constant 0 : i32
    %c0_i32_1 = arith.constant 0 : i32
    return %c0_i32, %c0_i32_0 : i32, i32
  }
  func.func @transform_2(%arg0: i32) -> (i32, i32) {
    %c0_i32 = arith.constant 0 : i32
    %c0_i32_0 = arith.constant 0 : i32
    return %arg0, %c0_i32 : i32, i32
  }
}

module attributes {stable_mosaic.version = 11 : i64} {
  func.func @_conv3x3_stats_kernel(%arg0: i32, %arg1: i32, %arg2: memref<1x4x10x128xbf16, #tpu.memory_space<vmem>>, %arg3: memref<1x1x10x128xbf16, #tpu.memory_space<vmem>>, %arg4: memref<1x1x10x128xbf16, #tpu.memory_space<vmem>>, %arg5: memref<9x128x128xbf16, #tpu.memory_space<vmem>>, %arg6: memref<1x4x8x128xbf16, #tpu.memory_space<vmem>>, %arg7: memref<1x1x8x128xf32, #tpu.memory_space<vmem>>, %arg8: memref<1x1x8x128xf32, #tpu.memory_space<vmem>>) attributes {dimension_semantics = [#tpu.dimension_semantics<parallel>, #tpu.dimension_semantics<parallel>], iteration_bounds = array<i64: 2, 2>, scalar_prefetch = 0 : i64, scratch_operands = 0 : i64, tpu.core_type = #tpu.core_type<tc>, window_params = [{transform_indices = @transform_0, window_bounds = array<i64: 1, 4, 10, 128>}, {transform_indices = @transform_1, window_bounds = array<i64: 1, 1, 10, 128>}, {transform_indices = @transform_2, window_bounds = array<i64: 1, 1, 10, 128>}, {pipeline_mode = #tpu.pipeline_mode<synchronous>, transform_indices = @transform_3, window_bounds = array<i64: 9, 128, 128>}, {transform_indices = @transform_4, window_bounds = array<i64: 1, 4, 8, 128>}, {transform_indices = @transform_5, window_bounds = array<i64: 1, 1, 8, 128>}, {transform_indices = @transform_6, window_bounds = array<i64: 1, 1, 8, 128>}]} {
    %c0 = arith.constant 0 : index
    %c0_0 = arith.constant 0 : index
    %c0_1 = arith.constant 0 : index
    %c0_2 = arith.constant 0 : index
    %0 = vector.load %arg2[%c0, %c0_0, %c0_1, %c0_2] : memref<1x4x10x128xbf16, #tpu.memory_space<vmem>>, vector<1x4x10x128xbf16>
    %1 = vector.shape_cast %0 : vector<1x4x10x128xbf16> to vector<4x10x128xbf16>
    %c0_3 = arith.constant 0 : index
    %c0_4 = arith.constant 0 : index
    %c0_5 = arith.constant 0 : index
    %c0_6 = arith.constant 0 : index
    %2 = vector.load %arg3[%c0_3, %c0_4, %c0_5, %c0_6] : memref<1x1x10x128xbf16, #tpu.memory_space<vmem>>, vector<1x1x10x128xbf16>
    %3 = vector.shape_cast %2 : vector<1x1x10x128xbf16> to vector<1x10x128xbf16>
    %c0_7 = arith.constant 0 : index
    %c0_8 = arith.constant 0 : index
    %c0_9 = arith.constant 0 : index
    %c0_10 = arith.constant 0 : index
    %4 = vector.load %arg4[%c0_7, %c0_8, %c0_9, %c0_10] : memref<1x1x10x128xbf16, #tpu.memory_space<vmem>>, vector<1x1x10x128xbf16>
    %5 = vector.shape_cast %4 : vector<1x1x10x128xbf16> to vector<1x10x128xbf16>
    %6 = tpu.concatenate %1, %3, %5 in 0 : vector<4x10x128xbf16>, vector<1x10x128xbf16>, vector<1x10x128xbf16> -> vector<6x10x128xbf16>
    %cst = arith.constant 0.000000e+00 : f32
    %7 = vector.broadcast %cst : f32 to vector<32x128xf32>
    %8 = vector.extract_strided_slice %6 {offsets = [0, 0, 0], sizes = [4, 8, 128], strides = [1, 1, 1]} : vector<6x10x128xbf16> to vector<4x8x128xbf16>
    %9 = vector.shape_cast %8 : vector<4x8x128xbf16> to vector<32x128xbf16>
    %c0_11 = arith.constant 0 : index
    %c0_12 = arith.constant 0 : index
    %c0_13 = arith.constant 0 : index
    %10 = vector.load %arg5[%c0_11, %c0_12, %c0_13] : memref<9x128x128xbf16, #tpu.memory_space<vmem>>, vector<1x128x128xbf16>
    %11 = vector.shape_cast %10 : vector<1x128x128xbf16> to vector<128x128xbf16>
    %cst_14 = arith.constant dense<0.000000e+00> : vector<32x128xf32>
    %12 = tpu.matmul %9, %11, %cst_14 {dimension_numbers = #tpu.dot_dimension_numbers<[1], [0], [0], [1], [0, 0, 1, 1], [], []>} : vector<32x128xbf16>, vector<128x128xbf16>, vector<32x128xf32> -> vector<32x128xf32>
    %13 = arith.addf %7, %12 : vector<32x128xf32>
    %14 = vector.extract_strided_slice %6 {offsets = [0, 1, 0], sizes = [4, 8, 128], strides = [1, 1, 1]} : vector<6x10x128xbf16> to vector<4x8x128xbf16>
    %15 = vector.shape_cast %14 : vector<4x8x128xbf16> to vector<32x128xbf16>
    %c1 = arith.constant 1 : index
    %c0_15 = arith.constant 0 : index
    %c0_16 = arith.constant 0 : index
    %16 = vector.load %arg5[%c1, %c0_15, %c0_16] : memref<9x128x128xbf16, #tpu.memory_space<vmem>>, vector<1x128x128xbf16>
    %17 = vector.shape_cast %16 : vector<1x128x128xbf16> to vector<128x128xbf16>
    %cst_17 = arith.constant dense<0.000000e+00> : vector<32x128xf32>
    %18 = tpu.matmul %15, %17, %cst_17 {dimension_numbers = #tpu.dot_dimension_numbers<[1], [0], [0], [1], [0, 0, 1, 1], [], []>} : vector<32x128xbf16>, vector<128x128xbf16>, vector<32x128xf32> -> vector<32x128xf32>
    %19 = arith.addf %13, %18 : vector<32x128xf32>
    %20 = vector.extract_strided_slice %6 {offsets = [0, 2, 0], sizes = [4, 8, 128], strides = [1, 1, 1]} : vector<6x10x128xbf16> to vector<4x8x128xbf16>
    %21 = vector.shape_cast %20 : vector<4x8x128xbf16> to vector<32x128xbf16>
    %c2 = arith.constant 2 : index
    %c0_18 = arith.constant 0 : index
    %c0_19 = arith.constant 0 : index
    %22 = vector.load %arg5[%c2, %c0_18, %c0_19] : memref<9x128x128xbf16, #tpu.memory_space<vmem>>, vector<1x128x128xbf16>
    %23 = vector.shape_cast %22 : vector<1x128x128xbf16> to vector<128x128xbf16>
    %cst_20 = arith.constant dense<0.000000e+00> : vector<32x128xf32>
    %24 = tpu.matmul %21, %23, %cst_20 {dimension_numbers = #tpu.dot_dimension_numbers<[1], [0], [0], [1], [0, 0, 1, 1], [], []>} : vector<32x128xbf16>, vector<128x128xbf16>, vector<32x128xf32> -> vector<32x128xf32>
    %25 = arith.addf %19, %24 : vector<32x128xf32>
    %26 = vector.extract_strided_slice %6 {offsets = [1, 0, 0], sizes = [4, 8, 128], strides = [1, 1, 1]} : vector<6x10x128xbf16> to vector<4x8x128xbf16>
    %27 = vector.shape_cast %26 : vector<4x8x128xbf16> to vector<32x128xbf16>
    %c3 = arith.constant 3 : index
    %c0_21 = arith.constant 0 : index
    %c0_22 = arith.constant 0 : index
    %28 = vector.load %arg5[%c3, %c0_21, %c0_22] : memref<9x128x128xbf16, #tpu.memory_space<vmem>>, vector<1x128x128xbf16>
    %29 = vector.shape_cast %28 : vector<1x128x128xbf16> to vector<128x128xbf16>
    %cst_23 = arith.constant dense<0.000000e+00> : vector<32x128xf32>
    %30 = tpu.matmul %27, %29, %cst_23 {dimension_numbers = #tpu.dot_dimension_numbers<[1], [0], [0], [1], [0, 0, 1, 1], [], []>} : vector<32x128xbf16>, vector<128x128xbf16>, vector<32x128xf32> -> vector<32x128xf32>
    %31 = arith.addf %25, %30 : vector<32x128xf32>
    %32 = vector.extract_strided_slice %6 {offsets = [1, 1, 0], sizes = [4, 8, 128], strides = [1, 1, 1]} : vector<6x10x128xbf16> to vector<4x8x128xbf16>
    %33 = vector.shape_cast %32 : vector<4x8x128xbf16> to vector<32x128xbf16>
    %c4 = arith.constant 4 : index
    %c0_24 = arith.constant 0 : index
    %c0_25 = arith.constant 0 : index
    %34 = vector.load %arg5[%c4, %c0_24, %c0_25] : memref<9x128x128xbf16, #tpu.memory_space<vmem>>, vector<1x128x128xbf16>
    %35 = vector.shape_cast %34 : vector<1x128x128xbf16> to vector<128x128xbf16>
    %cst_26 = arith.constant dense<0.000000e+00> : vector<32x128xf32>
    %36 = tpu.matmul %33, %35, %cst_26 {dimension_numbers = #tpu.dot_dimension_numbers<[1], [0], [0], [1], [0, 0, 1, 1], [], []>} : vector<32x128xbf16>, vector<128x128xbf16>, vector<32x128xf32> -> vector<32x128xf32>
    %37 = arith.addf %31, %36 : vector<32x128xf32>
    %38 = vector.extract_strided_slice %6 {offsets = [1, 2, 0], sizes = [4, 8, 128], strides = [1, 1, 1]} : vector<6x10x128xbf16> to vector<4x8x128xbf16>
    %39 = vector.shape_cast %38 : vector<4x8x128xbf16> to vector<32x128xbf16>
    %c5 = arith.constant 5 : index
    %c0_27 = arith.constant 0 : index
    %c0_28 = arith.constant 0 : index
    %40 = vector.load %arg5[%c5, %c0_27, %c0_28] : memref<9x128x128xbf16, #tpu.memory_space<vmem>>, vector<1x128x128xbf16>
    %41 = vector.shape_cast %40 : vector<1x128x128xbf16> to vector<128x128xbf16>
    %cst_29 = arith.constant dense<0.000000e+00> : vector<32x128xf32>
    %42 = tpu.matmul %39, %41, %cst_29 {dimension_numbers = #tpu.dot_dimension_numbers<[1], [0], [0], [1], [0, 0, 1, 1], [], []>} : vector<32x128xbf16>, vector<128x128xbf16>, vector<32x128xf32> -> vector<32x128xf32>
    %43 = arith.addf %37, %42 : vector<32x128xf32>
    %44 = vector.extract_strided_slice %6 {offsets = [2, 0, 0], sizes = [4, 8, 128], strides = [1, 1, 1]} : vector<6x10x128xbf16> to vector<4x8x128xbf16>
    %45 = vector.shape_cast %44 : vector<4x8x128xbf16> to vector<32x128xbf16>
    %c6 = arith.constant 6 : index
    %c0_30 = arith.constant 0 : index
    %c0_31 = arith.constant 0 : index
    %46 = vector.load %arg5[%c6, %c0_30, %c0_31] : memref<9x128x128xbf16, #tpu.memory_space<vmem>>, vector<1x128x128xbf16>
    %47 = vector.shape_cast %46 : vector<1x128x128xbf16> to vector<128x128xbf16>
    %cst_32 = arith.constant dense<0.000000e+00> : vector<32x128xf32>
    %48 = tpu.matmul %45, %47, %cst_32 {dimension_numbers = #tpu.dot_dimension_numbers<[1], [0], [0], [1], [0, 0, 1, 1], [], []>} : vector<32x128xbf16>, vector<128x128xbf16>, vector<32x128xf32> -> vector<32x128xf32>
    %49 = arith.addf %43, %48 : vector<32x128xf32>
    %50 = vector.extract_strided_slice %6 {offsets = [2, 1, 0], sizes = [4, 8, 128], strides = [1, 1, 1]} : vector<6x10x128xbf16> to vector<4x8x128xbf16>
    %51 = vector.shape_cast %50 : vector<4x8x128xbf16> to vector<32x128xbf16>
    %c7 = arith.constant 7 : index
    %c0_33 = arith.constant 0 : index
    %c0_34 = arith.constant 0 : index
    %52 = vector.load %arg5[%c7, %c0_33, %c0_34] : memref<9x128x128xbf16, #tpu.memory_space<vmem>>, vector<1x128x128xbf16>
    %53 = vector.shape_cast %52 : vector<1x128x128xbf16> to vector<128x128xbf16>
    %cst_35 = arith.constant dense<0.000000e+00> : vector<32x128xf32>
    %54 = tpu.matmul %51, %53, %cst_35 {dimension_numbers = #tpu.dot_dimension_numbers<[1], [0], [0], [1], [0, 0, 1, 1], [], []>} : vector<32x128xbf16>, vector<128x128xbf16>, vector<32x128xf32> -> vector<32x128xf32>
    %55 = arith.addf %49, %54 : vector<32x128xf32>
    %56 = vector.extract_strided_slice %6 {offsets = [2, 2, 0], sizes = [4, 8, 128], strides = [1, 1, 1]} : vector<6x10x128xbf16> to vector<4x8x128xbf16>
    %57 = vector.shape_cast %56 : vector<4x8x128xbf16> to vector<32x128xbf16>
    %c8 = arith.constant 8 : index
    %c0_36 = arith.constant 0 : index
    %c0_37 = arith.constant 0 : index
    %58 = vector.load %arg5[%c8, %c0_36, %c0_37] : memref<9x128x128xbf16, #tpu.memory_space<vmem>>, vector<1x128x128xbf16>
    %59 = vector.shape_cast %58 : vector<1x128x128xbf16> to vector<128x128xbf16>
    %cst_38 = arith.constant dense<0.000000e+00> : vector<32x128xf32>
    %60 = tpu.matmul %57, %59, %cst_38 {dimension_numbers = #tpu.dot_dimension_numbers<[1], [0], [0], [1], [0, 0, 1, 1], [], []>} : vector<32x128xbf16>, vector<128x128xbf16>, vector<32x128xf32> -> vector<32x128xf32>
    %61 = arith.addf %55, %60 : vector<32x128xf32>
    %cst_39 = arith.constant dense<0.000000e+00> : vector<128xf32>
    %62 = vector.multi_reduction <add>, %61, %cst_39 [0] : vector<32x128xf32> to vector<128xf32>
    %63 = vector.shape_cast %62 : vector<128xf32> to vector<1x1x1x128xf32>
    %64 = arith.mulf %61, %61 : vector<32x128xf32>
    %cst_40 = arith.constant dense<0.000000e+00> : vector<128xf32>
    %65 = vector.multi_reduction <add>, %64, %cst_40 [0] : vector<32x128xf32> to vector<128xf32>
    %66 = vector.shape_cast %65 : vector<128xf32> to vector<1x1x1x128xf32>
    %67 = vector.shape_cast %63 : vector<1x1x1x128xf32> to vector<1x1x1x128xf32>
    %68 = vector.broadcast %67 : vector<1x1x1x128xf32> to vector<1x1x8x128xf32>
    %c0_41 = arith.constant 0 : index
    %c0_42 = arith.constant 0 : index
    %c0_43 = arith.constant 0 : index
    %c0_44 = arith.constant 0 : index
    %69 = vector.load %arg7[%c0_41, %c0_42, %c0_43, %c0_44] : memref<1x1x8x128xf32, #tpu.memory_space<vmem>>, vector<1x1x8x128xf32>
    tpu.vector_store %arg7[%c0_41, %c0_42, %c0_43, %c0_44], %68 {strides = array<i32>} : memref<1x1x8x128xf32, #tpu.memory_space<vmem>>, vector<1x1x8x128xf32>,
    %70 = vector.shape_cast %66 : vector<1x1x1x128xf32> to vector<1x1x1x128xf32>
    %71 = vector.broadcast %70 : vector<1x1x1x128xf32> to vector<1x1x8x128xf32>
    %c0_45 = arith.constant 0 : index
    %c0_46 = arith.constant 0 : index
    %c0_47 = arith.constant 0 : index
    %c0_48 = arith.constant 0 : index
    %72 = vector.load %arg8[%c0_45, %c0_46, %c0_47, %c0_48] : memref<1x1x8x128xf32, #tpu.memory_space<vmem>>, vector<1x1x8x128xf32>
    tpu.vector_store %arg8[%c0_45, %c0_46, %c0_47, %c0_48], %71 {strides = array<i32>} : memref<1x1x8x128xf32, #tpu.memory_space<vmem>>, vector<1x1x8x128xf32>,
    %73 = vector.shape_cast %61 : vector<32x128xf32> to vector<1x4x8x128xf32>
    %74 = arith.truncf %73 : vector<1x4x8x128xf32> to vector<1x4x8x128xbf16>
    %c0_49 = arith.constant 0 : index
    %c0_50 = arith.constant 0 : index
    %c0_51 = arith.constant 0 : index
    %c0_52 = arith.constant 0 : index
    %75 = vector.load %arg6[%c0_49, %c0_50, %c0_51, %c0_52] : memref<1x4x8x128xbf16, #tpu.memory_space<vmem>>, vector<1x4x8x128xbf16>
    tpu.vector_store %arg6[%c0_49, %c0_50, %c0_51, %c0_52], %74 {strides = array<i32>} : memref<1x4x8x128xbf16, #tpu.memory_space<vmem>>, vector<1x4x8x128xbf16>,
    return
  }
  func.func @transform_0(%arg0: i32, %arg1: i32) -> (i32, i32, i32, i32) {
    %c0_i32 = arith.constant 0 : i32
    %c0_i32_0 = arith.constant 0 : i32
    %c0_i32_1 = arith.constant 0 : i32
    return %arg0, %arg1, %c0_i32, %c0_i32_0 : i32, i32, i32, i32
  }
  func.func @transform_1(%arg0: i32, %arg1: i32) -> (i32, i32, i32, i32) {
    %c4_i32 = arith.constant 4 : i32
    %0 = arith.muli %arg1, %c4_i32 : i32
    %c4_i32_0 = arith.constant 4 : i32
    %1 = arith.addi %0, %c4_i32_0 : i32
    %c0_i32 = arith.constant 0 : i32
    %c0_i32_1 = arith.constant 0 : i32
    %c0_i32_2 = arith.constant 0 : i32
    return %arg0, %1, %c0_i32, %c0_i32_1 : i32, i32, i32, i32
  }
  func.func @transform_2(%arg0: i32, %arg1: i32) -> (i32, i32, i32, i32) {
    %c4_i32 = arith.constant 4 : i32
    %0 = arith.muli %arg1, %c4_i32 : i32
    %c4_i32_0 = arith.constant 4 : i32
    %1 = arith.addi %0, %c4_i32_0 : i32
    %c1_i32 = arith.constant 1 : i32
    %2 = arith.addi %1, %c1_i32 : i32
    %c0_i32 = arith.constant 0 : i32
    %c0_i32_1 = arith.constant 0 : i32
    %c0_i32_2 = arith.constant 0 : i32
    return %arg0, %2, %c0_i32, %c0_i32_1 : i32, i32, i32, i32
  }
  func.func @transform_3(%arg0: i32, %arg1: i32) -> (i32, i32, i32) {
    %c0_i32 = arith.constant 0 : i32
    %c0_i32_0 = arith.constant 0 : i32
    %c0_i32_1 = arith.constant 0 : i32
    %c0_i32_2 = arith.constant 0 : i32
    return %c0_i32, %c0_i32_0, %c0_i32_1 : i32, i32, i32
  }
  func.func @transform_4(%arg0: i32, %arg1: i32) -> (i32, i32, i32, i32) {
    %c0_i32 = arith.constant 0 : i32
    %c0_i32_0 = arith.constant 0 : i32
    %c0_i32_1 = arith.constant 0 : i32
    return %arg0, %arg1, %c0_i32, %c0_i32_0 : i32, i32, i32, i32
  }
  func.func @transform_5(%arg0: i32, %arg1: i32) -> (i32, i32, i32, i32) {
    %c0_i32 = arith.constant 0 : i32
    %c0_i32_0 = arith.constant 0 : i32
    %c0_i32_1 = arith.constant 0 : i32
    return %arg0, %arg1, %c0_i32, %c0_i32_0 : i32, i32, i32, i32
  }
  func.func @transform_6(%arg0: i32, %arg1: i32) -> (i32, i32, i32, i32) {
    %c0_i32 = arith.constant 0 : i32
    %c0_i32_0 = arith.constant 0 : i32
    %c0_i32_1 = arith.constant 0 : i32
    return %arg0, %arg1, %c0_i32, %c0_i32_0 : i32, i32, i32, i32
  }
}

module attributes {stable_mosaic.version = 11 : i64} {
  func.func @_bn_relu_kernel(%arg0: i32, %arg1: i32, %arg2: memref<1x4x8x128xbf16, #tpu.memory_space<vmem>>, %arg3: memref<1x1x1x128xf32, #tpu.memory_space<vmem>>, %arg4: memref<1x1x1x128xf32, #tpu.memory_space<vmem>>, %arg5: memref<1x4x8x128xbf16, #tpu.memory_space<vmem>>) attributes {dimension_semantics = [#tpu.dimension_semantics<parallel>, #tpu.dimension_semantics<parallel>], iteration_bounds = array<i64: 2, 2>, scalar_prefetch = 0 : i64, scratch_operands = 0 : i64, tpu.core_type = #tpu.core_type<tc>, window_params = [{transform_indices = @transform_0, window_bounds = array<i64: 1, 4, 8, 128>}, {pipeline_mode = #tpu.pipeline_mode<synchronous>, transform_indices = @transform_1, window_bounds = array<i64: 1, 1, 1, 128>}, {pipeline_mode = #tpu.pipeline_mode<synchronous>, transform_indices = @transform_2, window_bounds = array<i64: 1, 1, 1, 128>}, {transform_indices = @transform_3, window_bounds = array<i64: 1, 4, 8, 128>}]} {
    %c0 = arith.constant 0 : index
    %c0_0 = arith.constant 0 : index
    %c0_1 = arith.constant 0 : index
    %c0_2 = arith.constant 0 : index
    %0 = vector.load %arg2[%c0, %c0_0, %c0_1, %c0_2] : memref<1x4x8x128xbf16, #tpu.memory_space<vmem>>, vector<1x4x8x128xbf16>
    %1 = arith.extf %0 : vector<1x4x8x128xbf16> to vector<1x4x8x128xf32>
    %c0_3 = arith.constant 0 : index
    %c0_4 = arith.constant 0 : index
    %c0_5 = arith.constant 0 : index
    %c0_6 = arith.constant 0 : index
    %2 = vector.load %arg3[%c0_3, %c0_4, %c0_5, %c0_6] : memref<1x1x1x128xf32, #tpu.memory_space<vmem>>, vector<1x1x1x128xf32>
    %3 = vector.broadcast %2 : vector<1x1x1x128xf32> to vector<1x4x8x128xf32>
    %4 = arith.mulf %1, %3 : vector<1x4x8x128xf32>
    %c0_7 = arith.constant 0 : index
    %c0_8 = arith.constant 0 : index
    %c0_9 = arith.constant 0 : index
    %c0_10 = arith.constant 0 : index
    %5 = vector.load %arg4[%c0_7, %c0_8, %c0_9, %c0_10] : memref<1x1x1x128xf32, #tpu.memory_space<vmem>>, vector<1x1x1x128xf32>
    %6 = vector.broadcast %5 : vector<1x1x1x128xf32> to vector<1x4x8x128xf32>
    %7 = arith.addf %4, %6 : vector<1x4x8x128xf32>
    %cst = arith.constant 0.000000e+00 : f32
    %8 = vector.broadcast %cst : f32 to vector<1x4x8x128xf32>
    %9 = arith.maximumf %7, %8 : vector<1x4x8x128xf32>
    %10 = arith.truncf %9 : vector<1x4x8x128xf32> to vector<1x4x8x128xbf16>
    %c0_11 = arith.constant 0 : index
    %c0_12 = arith.constant 0 : index
    %c0_13 = arith.constant 0 : index
    %c0_14 = arith.constant 0 : index
    %11 = vector.load %arg5[%c0_11, %c0_12, %c0_13, %c0_14] : memref<1x4x8x128xbf16, #tpu.memory_space<vmem>>, vector<1x4x8x128xbf16>
    tpu.vector_store %arg5[%c0_11, %c0_12, %c0_13, %c0_14], %10 {strides = array<i32>} : memref<1x4x8x128xbf16, #tpu.memory_space<vmem>>, vector<1x4x8x128xbf16>,
    return
  }
  func.func @transform_0(%arg0: i32, %arg1: i32) -> (i32, i32, i32, i32) {
    %c0_i32 = arith.constant 0 : i32
    %c0_i32_0 = arith.constant 0 : i32
    %c0_i32_1 = arith.constant 0 : i32
    return %arg0, %arg1, %c0_i32, %c0_i32_0 : i32, i32, i32, i32
  }
  func.func @transform_1(%arg0: i32, %arg1: i32) -> (i32, i32, i32, i32) {
    %c0_i32 = arith.constant 0 : i32
    %c0_i32_0 = arith.constant 0 : i32
    %c0_i32_1 = arith.constant 0 : i32
    %c0_i32_2 = arith.constant 0 : i32
    %c0_i32_3 = arith.constant 0 : i32
    return %c0_i32, %c0_i32_0, %c0_i32_1, %c0_i32_2 : i32, i32, i32, i32
  }
  func.func @transform_2(%arg0: i32, %arg1: i32) -> (i32, i32, i32, i32) {
    %c0_i32 = arith.constant 0 : i32
    %c0_i32_0 = arith.constant 0 : i32
    %c0_i32_1 = arith.constant 0 : i32
    %c0_i32_2 = arith.constant 0 : i32
    %c0_i32_3 = arith.constant 0 : i32
    return %c0_i32, %c0_i32_0, %c0_i32_1, %c0_i32_2 : i32, i32, i32, i32
  }
  func.func @transform_3(%arg0: i32, %arg1: i32) -> (i32, i32, i32, i32) {
    %c0_i32 = arith.constant 0 : i32
    %c0_i32_0 = arith.constant 0 : i32
    %c0_i32_1 = arith.constant 0 : i32
    return %arg0, %arg1, %c0_i32, %c0_i32_0 : i32, i32, i32, i32
  }
}

module attributes {stable_mosaic.version = 11 : i64} {
  func.func @_bn_add_relu_kernel(%arg0: i32, %arg1: i32, %arg2: memref<1x4x8x128xbf16, #tpu.memory_space<vmem>>, %arg3: memref<1x4x8x128xbf16, #tpu.memory_space<vmem>>, %arg4: memref<1x1x1x128xf32, #tpu.memory_space<vmem>>, %arg5: memref<1x1x1x128xf32, #tpu.memory_space<vmem>>, %arg6: memref<1x4x8x128xf32, #tpu.memory_space<vmem>>) attributes {dimension_semantics = [#tpu.dimension_semantics<parallel>, #tpu.dimension_semantics<parallel>], iteration_bounds = array<i64: 2, 2>, scalar_prefetch = 0 : i64, scratch_operands = 0 : i64, tpu.core_type = #tpu.core_type<tc>, window_params = [{transform_indices = @transform_0, window_bounds = array<i64: 1, 4, 8, 128>}, {transform_indices = @transform_1, window_bounds = array<i64: 1, 4, 8, 128>}, {pipeline_mode = #tpu.pipeline_mode<synchronous>, transform_indices = @transform_2, window_bounds = array<i64: 1, 1, 1, 128>}, {pipeline_mode = #tpu.pipeline_mode<synchronous>, transform_indices = @transform_3, window_bounds = array<i64: 1, 1, 1, 128>}, {transform_indices = @transform_4, window_bounds = array<i64: 1, 4, 8, 128>}]} {
    %c0 = arith.constant 0 : index
    %c0_0 = arith.constant 0 : index
    %c0_1 = arith.constant 0 : index
    %c0_2 = arith.constant 0 : index
    %0 = vector.load %arg2[%c0, %c0_0, %c0_1, %c0_2] : memref<1x4x8x128xbf16, #tpu.memory_space<vmem>>, vector<1x4x8x128xbf16>
    %1 = arith.extf %0 : vector<1x4x8x128xbf16> to vector<1x4x8x128xf32>
    %c0_3 = arith.constant 0 : index
    %c0_4 = arith.constant 0 : index
    %c0_5 = arith.constant 0 : index
    %c0_6 = arith.constant 0 : index
    %2 = vector.load %arg3[%c0_3, %c0_4, %c0_5, %c0_6] : memref<1x4x8x128xbf16, #tpu.memory_space<vmem>>, vector<1x4x8x128xbf16>
    %3 = arith.extf %2 : vector<1x4x8x128xbf16> to vector<1x4x8x128xf32>
    %c0_7 = arith.constant 0 : index
    %c0_8 = arith.constant 0 : index
    %c0_9 = arith.constant 0 : index
    %c0_10 = arith.constant 0 : index
    %4 = vector.load %arg4[%c0_7, %c0_8, %c0_9, %c0_10] : memref<1x1x1x128xf32, #tpu.memory_space<vmem>>, vector<1x1x1x128xf32>
    %5 = vector.broadcast %4 : vector<1x1x1x128xf32> to vector<1x4x8x128xf32>
    %6 = arith.mulf %1, %5 : vector<1x4x8x128xf32>
    %7 = arith.addf %3, %6 : vector<1x4x8x128xf32>
    %c0_11 = arith.constant 0 : index
    %c0_12 = arith.constant 0 : index
    %c0_13 = arith.constant 0 : index
    %c0_14 = arith.constant 0 : index
    %8 = vector.load %arg5[%c0_11, %c0_12, %c0_13, %c0_14] : memref<1x1x1x128xf32, #tpu.memory_space<vmem>>, vector<1x1x1x128xf32>
    %9 = vector.broadcast %8 : vector<1x1x1x128xf32> to vector<1x4x8x128xf32>
    %10 = arith.addf %7, %9 : vector<1x4x8x128xf32>
    %cst = arith.constant 0.000000e+00 : f32
    %11 = vector.broadcast %cst : f32 to vector<1x4x8x128xf32>
    %12 = arith.maximumf %10, %11 : vector<1x4x8x128xf32>
    %c0_15 = arith.constant 0 : index
    %c0_16 = arith.constant 0 : index
    %c0_17 = arith.constant 0 : index
    %c0_18 = arith.constant 0 : index
    %13 = vector.load %arg6[%c0_15, %c0_16, %c0_17, %c0_18] : memref<1x4x8x128xf32, #tpu.memory_space<vmem>>, vector<1x4x8x128xf32>
    tpu.vector_store %arg6[%c0_15, %c0_16, %c0_17, %c0_18], %12 {strides = array<i32>} : memref<1x4x8x128xf32, #tpu.memory_space<vmem>>, vector<1x4x8x128xf32>,
    return
  }
  func.func @transform_0(%arg0: i32, %arg1: i32) -> (i32, i32, i32, i32) {
    %c0_i32 = arith.constant 0 : i32
    %c0_i32_0 = arith.constant 0 : i32
    %c0_i32_1 = arith.constant 0 : i32
    return %arg0, %arg1, %c0_i32, %c0_i32_0 : i32, i32, i32, i32
  }
  func.func @transform_1(%arg0: i32, %arg1: i32) -> (i32, i32, i32, i32) {
    %c0_i32 = arith.constant 0 : i32
    %c0_i32_0 = arith.constant 0 : i32
    %c0_i32_1 = arith.constant 0 : i32
    return %arg0, %arg1, %c0_i32, %c0_i32_0 : i32, i32, i32, i32
  }
  func.func @transform_2(%arg0: i32, %arg1: i32) -> (i32, i32, i32, i32) {
    %c0_i32 = arith.constant 0 : i32
    %c0_i32_0 = arith.constant 0 : i32
    %c0_i32_1 = arith.constant 0 : i32
    %c0_i32_2 = arith.constant 0 : i32
    %c0_i32_3 = arith.constant 0 : i32
    return %c0_i32, %c0_i32_0, %c0_i32_1, %c0_i32_2 : i32, i32, i32, i32
  }
  func.func @transform_3(%arg0: i32, %arg1: i32) -> (i32, i32, i32, i32) {
    %c0_i32 = arith.constant 0 : i32
    %c0_i32_0 = arith.constant 0 : i32
    %c0_i32_1 = arith.constant 0 : i32
    %c0_i32_2 = arith.constant 0 : i32
    %c0_i32_3 = arith.constant 0 : i32
    return %c0_i32, %c0_i32_0, %c0_i32_1, %c0_i32_2 : i32, i32, i32, i32
  }
  func.func @transform_4(%arg0: i32, %arg1: i32) -> (i32, i32, i32, i32) {
    %c0_i32 = arith.constant 0 : i32
    %c0_i32_0 = arith.constant 0 : i32
    %c0_i32_1 = arith.constant 0 : i32
    return %arg0, %arg1, %c0_i32, %c0_i32_0 : i32, i32, i32, i32
  }
}

</mosaic_0001>

<llo_original>
// kernel: resblock_forward.5
$region0: #{resblock_forward.5}
  #allocation0 [shape = 'u32[]', space=smem, size = 0x4, offset = 0x4, fixed_abs, tag = 'smem constant byte address 0x4 - core index']
  #allocation1 [shape = 'u32[72,128]{1,0:T(1,128)}', space=vmem, size = 0x9000, scoped, tag = 'internal scratch']
  %s0 = inlined_call_operand.vmem [shape: bf16[128,36], index: 0, kind: input, shape index: {}]
  %s1 = inlined_call_operand.vmem [shape: bf16[36,128], index: 1, kind: input, shape index: {}]
  %s2 = inlined_call_operand.vmem [shape: bf16[128,128], index: 2, kind: output, shape index: {}]
  %s3 = sld [smem:[#allocation0]]
  $region18: #{resblock_forward.5} parent=0
    _
  %s5 = ssub.s32 1, %s3
  %s6 = scalar_select 0, %s5, %s3
  // Predicated region
  $region2: #{resblock_forward.5} parent=0 // pred_check
    _
  $region3: #{resblock_forward.5} parent=0 // pred_check_branch
    %8 = sbr.rel (0) target = $region5
  $region4: #{resblock_forward.5} parent=0 // pred_region
    _
  $region5: #{resblock_forward.5} parent=0 // pred_fallthru
    _
  // Predicated region
  $region6: #{resblock_forward.5} parent=0 // pred_check
    _
  $region7: #{resblock_forward.5} parent=0 // pred_check_branch
    %10 = sbr.rel (0) target = $region9
  $region8: #{resblock_forward.5} parent=0 // pred_region
    _
  $region9: #{resblock_forward.5} parent=0 // pred_fallthru
    _
  %v12 = vld [vmem:[%s0] sm:$0xf]
  %v13 = vld [vmem:[%s0 + $0x4] sm:$0xf]
  %v14 = vld [vmem:[%s0 + $0x8] sm:$0xf]
  %v15 = vld [vmem:[%s0 + $0xc] sm:$0xf]
  %v16 = vld [vmem:[%s0 + $0x10] sm:$0xf]
  %v17 = vld [vmem:[%s0 + $0x14] sm:$0xf]
  %v18 = vld [vmem:[%s0 + $0x18] sm:$0xf]
  %v19 = vld [vmem:[%s0 + $0x1c] sm:$0xf]
  %v20 = vld [vmem:[%s0 + $0x20] sm:$0xf]
  %v21 = vld [vmem:[%s0 + $0x24] sm:$0xf]
  %v22 = vld [vmem:[%s0 + $0x28] sm:$0xf]
  %v23 = vld [vmem:[%s0 + $0x2c] sm:$0xf]
  %v24 = vld [vmem:[%s0 + $0x30] sm:$0xf]
  %v25 = vld [vmem:[%s0 + $0x34] sm:$0xf]
  %v26 = vld [vmem:[%s0 + $0x38] sm:$0xf]
  %v27 = vld [vmem:[%s0 + $0x3c] sm:$0xf]
  %v28 = vld [vmem:[%s1] sm:$0xf]
  %v29 = vld [vmem:[%s1 + $0x4] sm:$0xf]
  %v30 = vld [vmem:[%s1 + $0x8] sm:$0xf]
  %v31 = vld [vmem:[%s1 + $0xc] sm:$0xf]
  %v32 = vld [vmem:[%s1 + $0x10] sm:$0x3]
  %v49 = vunpack.c.l.b16 %v12
  %v50 = vunpack.c.l.b16 %v13
  %v51 = vunpack.c.l.b16 %v14
  %v52 = vunpack.c.l.b16 %v15
  %v53 = vunpack.c.l.b16 %v16
  %v54 = vunpack.c.l.b16 %v17
  %v55 = vunpack.c.l.b16 %v18
  %v56 = vunpack.c.l.b16 %v19
  %v57 = vunpack.c.l.b16 %v20
  %v58 = vunpack.c.l.b16 %v21
  %v59 = vunpack.c.l.b16 %v22
  %v60 = vunpack.c.l.b16 %v23
  %v61 = vunpack.c.l.b16 %v24
  %v62 = vunpack.c.l.b16 %v25
  %v63 = vunpack.c.l.b16 %v26
  %v64 = vunpack.c.l.b16 %v27
  %v65 = vpack.c.b16 %v50, %v49
  %v66 = vpack.c.b16 %v52, %v51
  %v67 = vpack.c.b16 %v54, %v53
  %v68 = vpack.c.b16 %v56, %v55
  %v69 = vpack.c.b16 %v58, %v57
  %v70 = vpack.c.b16 %v60, %v59
  %v71 = vpack.c.b16 %v62, %v61
  %v72 = vpack.c.b16 %v64, %v63
  %v78 = vunpack.c.l.b16 %v28
  %v79 = vunpack.c.l.b16 %v29
  %v80 = vunpack.c.l.b16 %v30
  %v81 = vunpack.c.l.b16 %v31
  %v82 = vunpack.c.l.b16 %v32
  %v83 = vpack.c.b16 %v79, %v78
  %v84 = vpack.c.b16 %v81, %v80
  %v85 = vpack.c.b16 %v82, %v82
  %vm88 = vcmask 293888
  %v90 = vsel %vm88, %v65, 0
  %v93 = vsel %vm88, %v66, 0
  %v96 = vsel %vm88, %v67, 0
  %v99 = vsel %vm88, %v68, 0
  %v102 = vsel %vm88, %v69, 0
  %v105 = vsel %vm88, %v70, 0
  %v108 = vsel %vm88, %v71, 0
  %v111 = vsel %vm88, %v72, 0
  %vm113 = vcmask 1041408
  %v115 = vsel %vm113, %v85, 0
  %117 = vmatpush.bf16.msra.mxu0 0
  %118 = vmatpush.bf16.msra.mxu0 0
  %119 = vmatpush.bf16.msra.mxu0 0
  %120 = vmatpush.bf16.msra.mxu0 0
  %121 = vmatpush.bf16.msra.mxu0 0
  %122 = vmatpush.bf16.msra.mxu0 %v115
  %123 = vmatpush.bf16.msra.mxu0 %v84
  %124 = vmatpush.bf16.msra.mxu0 %v83
  %125 = vmatmul.bf16.gmra.mxu0 %v90
  %v126 = vpop.f32.mrf.mxu0
  %v127 = vadd.f32 0.0, %v126
  %v128 = vpop.f32.mrf.mxu0
  %v129 = vadd.f32 0.0, %v128
  %130 = vmatmul.bf16.gmra.mxu0 %v93
  %v131 = vpop.f32.mrf.mxu0
  %v132 = vadd.f32 0.0, %v131
  %v133 = vpop.f32.mrf.mxu0
  %v134 = vadd.f32 0.0, %v133
  %135 = vmatmul.bf16.gmra.mxu0 %v96
  %v136 = vpop.f32.mrf.mxu0
  %v137 = vadd.f32 0.0, %v136
  %v138 = vpop.f32.mrf.mxu0
  %v139 = vadd.f32 0.0, %v138
  %140 = vmatmul.bf16.gmra.mxu0 %v99
  %v141 = vpop.f32.mrf.mxu0
  %v142 = vadd.f32 0.0, %v141
  %v143 = vpop.f32.mrf.mxu0
  %v144 = vadd.f32 0.0, %v143
  %145 = vmatmul.bf16.gmra.mxu0 %v102
  %v146 = vpop.f32.mrf.mxu0
  %v147 = vadd.f32 0.0, %v146
  %v148 = vpop.f32.mrf.mxu0
  %v149 = vadd.f32 0.0, %v148
  %150 = vmatmul.bf16.gmra.mxu0 %v105
  %v151 = vpop.f32.mrf.mxu0
  %v152 = vadd.f32 0.0, %v151
  %v153 = vpop.f32.mrf.mxu0
  %v154 = vadd.f32 0.0, %v153
  %155 = vmatmul.bf16.gmra.mxu0 %v108
  %v156 = vpop.f32.mrf.mxu0
  %v157 = vadd.f32 0.0, %v156
  %v158 = vpop.f32.mrf.mxu0
  %v159 = vadd.f32 0.0, %v158
  %160 = vmatmul.bf16.gmra.mxu0 %v111
  %v161 = vpop.f32.mrf.mxu0
  %v162 = vadd.f32 0.0, %v161
  %v163 = vpop.f32.mrf.mxu0
  %v164 = vadd.f32 0.0, %v163
  %165 = vdwg.mxu0
  %v166 = vpack.c.bf16 %v127, %v127
  %v167 = vpack.c.bf16 %v129, %v129
  %v168 = vpack.c.bf16 %v132, %v132
  %v169 = vpack.c.bf16 %v134, %v134
  %v170 = vpack.c.bf16 %v137, %v137
  %v171 = vpack.c.bf16 %v139, %v139
  %v172 = vpack.c.bf16 %v142, %v142
  %v173 = vpack.c.bf16 %v144, %v144
  %v174 = vpack.c.bf16 %v147, %v147
  %v175 = vpack.c.bf16 %v149, %v149
  %v176 = vpack.c.bf16 %v152, %v152
  %v177 = vpack.c.bf16 %v154, %v154
  %v178 = vpack.c.bf16 %v157, %v157
  %v179 = vpack.c.bf16 %v159, %v159
  %v180 = vpack.c.bf16 %v162, %v162
  %v181 = vpack.c.bf16 %v164, %v164
  %182 = vst [vmem:[%s2] sm:$0xf] %v166
  %183 = vst [vmem:[%s2 + $0x4] sm:$0xf] %v167
  %184 = vst [vmem:[%s2 + $0x8] sm:$0xf] %v168
  %185 = vst [vmem:[%s2 + $0xc] sm:$0xf] %v169
  %186 = vst [vmem:[%s2 + $0x10] sm:$0xf] %v170
  %187 = vst [vmem:[%s2 + $0x14] sm:$0xf] %v171
  %188 = vst [vmem:[%s2 + $0x18] sm:$0xf] %v172
  %189 = vst [vmem:[%s2 + $0x1c] sm:$0xf] %v173
  %190 = vst [vmem:[%s2 + $0x20] sm:$0xf] %v174
  %191 = vst [vmem:[%s2 + $0x24] sm:$0xf] %v175
  %192 = vst [vmem:[%s2 + $0x28] sm:$0xf] %v176
  %193 = vst [vmem:[%s2 + $0x2c] sm:$0xf] %v177
  %194 = vst [vmem:[%s2 + $0x30] sm:$0xf] %v178
  %195 = vst [vmem:[%s2 + $0x34] sm:$0xf] %v179
  %196 = vst [vmem:[%s2 + $0x38] sm:$0xf] %v180
  %197 = vst [vmem:[%s2 + $0x3c] sm:$0xf] %v181
  // Predicated region
  $region10: #{resblock_forward.5} parent=0 // pred_check
    _
  $region11: #{resblock_forward.5} parent=0 // pred_check_branch
    %199 = sbr.rel (0) target = $region13
  $region12: #{resblock_forward.5} parent=0 // pred_region
    _
  $region13: #{resblock_forward.5} parent=0 // pred_fallthru
    _
  // Predicated region
  $region14: #{resblock_forward.5} parent=0 // pred_check
    _
  $region15: #{resblock_forward.5} parent=0 // pred_check_branch
    %201 = sbr.rel (0) target = $region17
  $region16: #{resblock_forward.5} parent=0 // pred_region
    _
  $region17: #{resblock_forward.5} parent=0 // pred_fallthru
    _

// kernel: resblock_forward.7
$region0: #{resblock_forward.7}
  #allocation0 [shape = 'u32[]', space=smem, size = 0x4, offset = 0x4, fixed_abs, tag = 'smem constant byte address 0x4 - core index']
  #allocation1 [shape = 'u32[72,128]{1,0:T(1,128)}', space=vmem, size = 0x9000, scoped, tag = 'internal scratch']
  %s0 = inlined_call_operand.vmem [shape: bf16[2,8,8,128], index: 0, kind: input, shape index: {}]
  %s1 = inlined_call_operand.vmem [shape: f32[1,1,1,128], index: 1, kind: input, shape index: {}]
  %s2 = inlined_call_operand.vmem [shape: f32[1,1,1,128], index: 2, kind: input, shape index: {}]
  %s3 = inlined_call_operand.vmem [shape: bf16[2,8,8,128], index: 3, kind: output, shape index: {}]
  %s4 = sld [smem:[#allocation0]]
  $region45: #{resblock_forward.7} parent=0
    _
  %s6 = ssub.s32 1, %s4
  %s7 = scalar_select 0, %s6, %s4
  loop: start=0, step=1, limit=6
  $region2: #{resblock_forward.7} parent=0 // loop_pre_header
    _
  $region3: #{resblock_forward.7} parent=0 // loop_header
    %s9 = sphi 0, %s13
    %p10 = scmp.ge.s32.totalorder %s9, 6
    %s16 = sphi 0, %s28
    %s17 = sphi 0, %s24
    %s18 = sphi 0, %s16
    %s19 = sphi 0, %s17
    %s20 = sphi 0, %s18
    %s21 = sphi 0, %s19
    %s33 = sphi 0, %s35
    %s36 = sphi 0, %s33
    %s37 = sphi 0, %s36
    %s53 = sphi 0, %s37
    %s57 = sphi 0, %s57
    %s59 = sphi 0, %s57
    %s60 = sphi 0, %s59
    %s74 = sphi 0, %s60
    %s78 = sphi 0, %s78
    %s80 = sphi 0, %s78
    %s81 = sphi 0, %s80
    %s95 = sphi 0, %s81
    %s103 = sphi 0, %s105
    %s106 = sphi 0, %s103
    %s107 = sphi 0, %s106
    %s123 = sphi 0, %s107
  $region4: #{resblock_forward.7} parent=0 // loop_header_branch
    %12 = sbr.rel (%p10) target = $region8
  $region5: #{resblock_forward.7} parent=0 // loop_body
    %s14 = ssub.s32 %s9, 1
    %s15 = ssub.s32 %s9, 2
    %s22 = sadd.s32 1, %s17
    %p23 = scmp.ge.s32.totalorder %s22, 2
    %s24 = scalar_select %p23, 0, %s22
    %s25 = sadd.s32 1, %s16
    %s26 = scalar_select %p23, %s25, %s16
    %p27 = scmp.ge.s32.totalorder %s26, 2
    %s28 = scalar_select %p27, 0, %s26
    %s29 = ssub.s32 %s16, %s28
    %s30 = ssub.s32 %s17, %s24
    %s31 = sor.u32 %s29, %s30
    %p32 = scmp.eq.s32.totalorder %s31, 0
    %s34 = sadd.s32 %s33, 1
    %s35 = scalar_select %p32, %s33, %s34
    %p38 = pneg %p32
    %p39 = scmp.eq.s32.totalorder %s9, 3
    %p40 = por %p38, %p39
    %p41 = scmp.ne.s32.totalorder %s33, %s36
    %p42 = scmp.eq.s32.totalorder %s9, 0
    %p43 = por %p41, %p42
    %p44 = scmp.ne.s32.totalorder %s33, %s36
    %p45 = scmp.eq.s32.totalorder %s14, 3
    %p46 = por %p44, %p45
    %p47 = scmp.ne.s32.totalorder %s36, %s37
    %p48 = scmp.eq.s32.totalorder %s14, 0
    %p49 = por %p47, %p48
    %p50 = scmp.ne.s32.totalorder %s36, %s37
    %p51 = scmp.eq.s32.totalorder %s15, 3
    %p52 = por %p50, %p51
    %p54 = scmp.ne.s32.totalorder %s37, %s53
    %p55 = scmp.eq.s32.totalorder %s15, 0
    %p56 = por %p54, %p55
    %s58 = sadd.s32 %s57, 1
    %p61 = scmp.eq.s32.totalorder %s9, 3
    %p62 = scmp.ne.s32.totalorder %s57, %s59
    %p63 = scmp.eq.s32.totalorder %s9, 0
    %p64 = por %p62, %p63
    %p65 = scmp.ne.s32.totalorder %s57, %s59
    %p66 = scmp.eq.s32.totalorder %s14, 3
    %p67 = por %p65, %p66
    %p68 = scmp.ne.s32.totalorder %s59, %s60
    %p69 = scmp.eq.s32.totalorder %s14, 0
    %p70 = por %p68, %p69
    %p71 = scmp.ne.s32.totalorder %s59, %s60
    %p72 = scmp.eq.s32.totalorder %s15, 3
    %p73 = por %p71, %p72
    %p75 = scmp.ne.s32.totalorder %s60, %s74
    %p76 = scmp.eq.s32.totalorder %s15, 0
    %p77 = por %p75, %p76
    %s79 = sadd.s32 %s78, 1
    %p82 = scmp.eq.s32.totalorder %s9, 3
    %p83 = scmp.ne.s32.totalorder %s78, %s80
    %p84 = scmp.eq.s32.totalorder %s9, 0
    %p85 = por %p83, %p84
    %p86 = scmp.ne.s32.totalorder %s78, %s80
    %p87 = scmp.eq.s32.totalorder %s14, 3
    %p88 = por %p86, %p87
    %p89 = scmp.ne.s32.totalorder %s80, %s81
    %p90 = scmp.eq.s32.totalorder %s14, 0
    %p91 = por %p89, %p90
    %p92 = scmp.ne.s32.totalorder %s80, %s81
    %p93 = scmp.eq.s32.totalorder %s15, 3
    %p94 = por %p92, %p93
    %p96 = scmp.ne.s32.totalorder %s81, %s95
    %p97 = scmp.eq.s32.totalorder %s15, 0
    %p98 = por %p96, %p97
    %s99 = ssub.s32 %s16, %s28
    %s100 = ssub.s32 %s17, %s24
    %s101 = sor.u32 %s99, %s100
    %p102 = scmp.eq.s32.totalorder %s101, 0
    %s104 = sadd.s32 %s103, 1
    %s105 = scalar_select %p102, %s103, %s104
    %p108 = pneg %p102
    %p109 = scmp.eq.s32.totalorder %s9, 3
    %p110 = por %p108, %p109
    %p111 = scmp.ne.s32.totalorder %s103, %s106
    %p112 = scmp.eq.s32.totalorder %s9, 0
    %p113 = por %p111, %p112
    %p114 = scmp.ne.s32.totalorder %s103, %s106
    %p115 = scmp.eq.s32.totalorder %s14, 3
    %p116 = por %p114, %p115
    %p117 = scmp.ne.s32.totalorder %s106, %s107
    %p118 = scmp.eq.s32.totalorder %s14, 0
    %p119 = por %p117, %p118
    %p120 = scmp.ne.s32.totalorder %s106, %s107
    %p121 = scmp.eq.s32.totalorder %s15, 3
    %p122 = por %p120, %p121
    %p124 = scmp.ne.s32.totalorder %s107, %s123
    %p125 = scmp.eq.s32.totalorder %s15, 0
    %p126 = por %p124, %p125
    %p127 = scmp.le.s32.totalorder 1, %s9
    %p128 = scmp.lt.s32.totalorder %s9, 5
    %p129 = pnand %p127, %p128
    %p130 = pneg %p129
    // Predicated region
    $region9: #{resblock_forward.7} parent=5 // pred_check
      _
    $region10: #{resblock_forward.7} parent=5 // pred_check_branch
      %132 = sbr.rel (%p129) target = $region12
    $region11: #{resblock_forward.7} parent=5 // pred_region
      %s133 = ssub.s32 %s9, 1
      // Predicated region
      $region13: #{resblock_forward.7} parent=11 // pred_check
        %p134 = pneg %p70
      $region14: #{resblock_forward.7} parent=11 // pred_check_branch
        %136 = sbr.rel (%p134) target = $region16
      $region15: #{resblock_forward.7} parent=11 // pred_region
        _
      $region16: #{resblock_forward.7} parent=11 // pred_fallthru
        _
      // Predicated region
      $region17: #{resblock_forward.7} parent=11 // pred_check
        %p137 = pneg %p91
      $region18: #{resblock_forward.7} parent=11 // pred_check_branch
        %139 = sbr.rel (%p137) target = $region20
      $region19: #{resblock_forward.7} parent=11 // pred_region
        _
      $region20: #{resblock_forward.7} parent=11 // pred_fallthru
        _
    $region12: #{resblock_forward.7} parent=5 // pred_fallthru
      _
    %p140 = scmp.lt.s32.totalorder %s9, 4
    // Predicated region
    $region21: #{resblock_forward.7} parent=5 // pred_check
      %p141 = pneg %p140
    $region22: #{resblock_forward.7} parent=5 // pred_check_branch
      %143 = sbr.rel (%p141) target = $region24
    $region23: #{resblock_forward.7} parent=5 // pred_region
      // Predicated region
      $region25: #{resblock_forward.7} parent=23 // pred_check
        %p144 = pneg %p43
      $region26: #{resblock_forward.7} parent=23 // pred_check_branch
        %146 = sbr.rel (%p144) target = $region28
      $region27: #{resblock_forward.7} parent=23 // pred_region
        %s147 = smul.u32 4, %s17
        %p148 = scmp.lt.s32.totalorder %s16, 1
        %s149 = scalar_select %p148, %s16, 1
        %p150 = scmp.lt.s32.totalorder %s147, 7
        %s151 = scalar_select %p150, %s147, 7
        %s152 = smul.addr %s149, 8
        %s153 = sadd.s32 %s151, %s152
        %s154 = smul.addr %s153, 4
        %s155 = scalar_lea.vmem %s0, %s154
        %s156 = smul.u32 4, %s17
      $region28: #{resblock_forward.7} parent=23 // pred_fallthru
        _
    $region24: #{resblock_forward.7} parent=5 // pred_fallthru
      _
    %p157 = scmp.le.s32.totalorder 1, %s9
    %p158 = scmp.lt.s32.totalorder %s9, 5
    %p159 = pnand %p157, %p158
    %p160 = pneg %p159
    // Predicated region
    $region29: #{resblock_forward.7} parent=5 // pred_check
      _
    $region30: #{resblock_forward.7} parent=5 // pred_check_branch
      %162 = sbr.rel (%p159) target = $region32
    $region31: #{resblock_forward.7} parent=5 // pred_region
      %s163 = ssub.s32 %s9, 1
      %s164 = smul.u32 4, %s19
      %p165 = scmp.lt.s32.totalorder %s18, 1
      %s166 = scalar_select %p165, %s18, 1
      %p167 = scmp.lt.s32.totalorder %s164, 7
      %s168 = scalar_select %p167, %s164, 7
      %s169 = smul.addr %s166, 8
      %s170 = sadd.s32 %s168, %s169
      %s171 = smul.addr %s170, 4
      %s172 = scalar_lea.vmem %s0, %s171
      %p173 = pneg %p49
      %p174 = pneg %p46
      %p175 = pneg %p70
      %p176 = pneg %p67
      %p177 = pneg %p91
      %p178 = pneg %p88
      %p179 = pneg %p119
      %p180 = pneg %p116
      %s181 = smul.u32 4, %s19
      %p182 = scmp.lt.s32.totalorder %s18, 1
      %s183 = scalar_select %p182, %s18, 1
      %p184 = scmp.lt.s32.totalorder %s181, 7
      %s185 = scalar_select %p184, %s181, 7
      %s186 = smul.addr %s183, 8
      %s187 = sadd.s32 %s185, %s186
      %s188 = smul.addr %s187, 4
      %s189 = scalar_lea.vmem %s3, %s188
      %s190 = smul.u32 4, %s19
      %p191 = scmp.lt.s32.totalorder %s18, 1
      %s192 = scalar_select %p191, %s18, 1
      %p193 = scmp.lt.s32.totalorder %s190, 7
      %s194 = scalar_select %p193, %s190, 7
      %s195 = smul.addr %s192, 8
      %s196 = sadd.s32 %s194, %s195
      %s197 = smul.addr %s196, 4
      %s198 = scalar_lea.vmem %s0, %s197
      %s199 = smul.u32 4, %s19
      %s200 = smul.u32 4, %s19
      %p201 = scmp.lt.s32.totalorder %s18, 1
      %s202 = scalar_select %p201, %s18, 1
      %p203 = scmp.lt.s32.totalorder %s200, 7
      %s204 = scalar_select %p203, %s200, 7
      %s205 = smul.addr %s202, 8
      %s206 = sadd.s32 %s204, %s205
      %s207 = smul.addr %s206, 4
      %s208 = scalar_lea.vmem %s3, %s207
      %s209 = smul.u32 4, %s19
      %v210 = vld [vmem:[%s198] sm:$0xf]
      %v211 = vld [vmem:[%s198 + $0x4] sm:$0xf]
      %v212 = vld [vmem:[%s198 + $0x8] sm:$0xf]
      %v213 = vld [vmem:[%s198 + $0xc] sm:$0xf]
      %v214 = vunpack.c.l.bf16 %v210
      %v215 = vunpack.c.l.bf16 %v211
      %v216 = vunpack.c.l.bf16 %v212
      %v217 = vunpack.c.l.bf16 %v213
      %v218 = vld [vmem:[%s1] sm:$0x1]
      %v220 = vperm.slane %v218, 0
      %v222 = vmul.f32 %v214, %v220
      %v223 = vmul.f32 %v215, %v220
      %v224 = vmul.f32 %v216, %v220
      %v225 = vmul.f32 %v217, %v220
      %v226 = vld [vmem:[%s2] sm:$0x1]
      %v228 = vperm.slane %v226, 0
      %v230 = vadd.f32 %v222, %v228
      %v231 = vadd.f32 %v223, %v228
      %v232 = vadd.f32 %v224, %v228
      %v233 = vadd.f32 %v225, %v228
      %v234 = vmax.f32 %v230, 0.0
      %v235 = vmax.f32 %v231, 0.0
      %v236 = vmax.f32 %v232, 0.0
      %v237 = vmax.f32 %v233, 0.0
      %v238 = vpack.c.bf16 %v234, %v234
      %v239 = vpack.c.bf16 %v235, %v235
      %v240 = vpack.c.bf16 %v236, %v236
      %v241 = vpack.c.bf16 %v237, %v237
      %242 = vst [vmem:[%s208] sm:$0xf] %v238
      %243 = vst [vmem:[%s208 + $0x4] sm:$0xf] %v239
      %244 = vst [vmem:[%s208 + $0x8] sm:$0xf] %v240
      %245 = vst [vmem:[%s208 + $0xc] sm:$0xf] %v241
      %s246 = smul.u32 4, %s19
      %p247 = scmp.lt.s32.totalorder %s18, 1
      %s248 = scalar_select %p247, %s18, 1
      %p249 = scmp.lt.s32.totalorder %s246, 7
      %s250 = scalar_select %p249, %s246, 7
      %s251 = smul.addr %s248, 8
      %s252 = sadd.s32 %s250, %s251
      %s253 = smul.addr %s252, 4
      %s254 = scalar_lea.vmem %s3, %s253
      // Predicated region
      $region33: #{resblock_forward.7} parent=31 // pred_check
        %p255 = pneg %p116
      $region34: #{resblock_forward.7} parent=31 // pred_check_branch
        %257 = sbr.rel (%p255) target = $region36
      $region35: #{resblock_forward.7} parent=31 // pred_region
        %s258 = smul.u32 4, %s19
      $region36: #{resblock_forward.7} parent=31 // pred_fallthru
        _
    $region32: #{resblock_forward.7} parent=5 // pred_fallthru
      _
    %p259 = scmp.le.s32.totalorder 2, %s9
    // Predicated region
    $region37: #{resblock_forward.7} parent=5 // pred_check
      %p260 = pneg %p259
    $region38: #{resblock_forward.7} parent=5 // pred_check_branch
      %262 = sbr.rel (%p260) target = $region40
    $region39: #{resblock_forward.7} parent=5 // pred_region
      %s263 = ssub.s32 %s9, 2
      // Predicated region
      $region41: #{resblock_forward.7} parent=39 // pred_check
        %p264 = pneg %p122
      $region42: #{resblock_forward.7} parent=39 // pred_check_branch
        %266 = sbr.rel (%p264) target = $region44
      $region43: #{resblock_forward.7} parent=39 // pred_region
        %s267 = smul.u32 4, %s21
        %p268 = scmp.lt.s32.totalorder %s20, 1
        %s269 = scalar_select %p268, %s20, 1
        %p270 = scmp.lt.s32.totalorder %s267, 7
        %s271 = scalar_select %p270, %s267, 7
        %s272 = smul.addr %s269, 8
        %s273 = sadd.s32 %s271, %s272
        %s274 = smul.addr %s273, 4
        %s275 = scalar_lea.vmem %s3, %s274
      $region44: #{resblock_forward.7} parent=39 // pred_fallthru
        _
    $region40: #{resblock_forward.7} parent=5 // pred_fallthru
      _
  $region6: #{resblock_forward.7} parent=0 // loop_footer
    %s13 = sadd.s32 1, %s9
  $region7: #{resblock_forward.7} parent=0 // loop_footer_branch
    %8 = sbr.rel target = $region3
  $region8: #{resblock_forward.7} parent=0 // loop_exit
    _

// kernel: resblock_forward.9
$region0: #{resblock_forward.9}
  #allocation0 [shape = 'u32[]', space=smem, size = 0x4, offset = 0x4, fixed_abs, tag = 'smem constant byte address 0x4 - core index']
  #allocation1 [shape = 'u32[72,128]{1,0:T(1,128)}', space=vmem, size = 0x9000, scoped, tag = 'internal scratch']
  %s0 = inlined_call_operand.vmem [shape: bf16[2,8,8,128], index: 0, kind: input, shape index: {}]
  %s1 = inlined_call_operand.vmem [shape: bf16[2,8,8,128], index: 1, kind: input, shape index: {}]
  %s2 = inlined_call_operand.vmem [shape: f32[1,1,1,128], index: 2, kind: input, shape index: {}]
  %s3 = inlined_call_operand.vmem [shape: f32[1,1,1,128], index: 3, kind: input, shape index: {}]
  %s4 = inlined_call_operand.vmem [shape: f32[2,8,8,128], index: 4, kind: output, shape index: {}]
  %s5 = sld [smem:[#allocation0]]
  $region49: #{resblock_forward.9} parent=0
    _
  %s7 = ssub.s32 1, %s5
  %s8 = scalar_select 0, %s7, %s5
  loop: start=0, step=1, limit=6
  $region2: #{resblock_forward.9} parent=0 // loop_pre_header
    _
  $region3: #{resblock_forward.9} parent=0 // loop_header
    %s10 = sphi 0, %s14
    %p11 = scmp.ge.s32.totalorder %s10, 6
    %s17 = sphi 0, %s29
    %s18 = sphi 0, %s25
    %s19 = sphi 0, %s17
    %s20 = sphi 0, %s18
    %s21 = sphi 0, %s19
    %s22 = sphi 0, %s20
    %s34 = sphi 0, %s36
    %s37 = sphi 0, %s34
    %s38 = sphi 0, %s37
    %s54 = sphi 0, %s38
    %s62 = sphi 0, %s64
    %s65 = sphi 0, %s62
    %s66 = sphi 0, %s65
    %s82 = sphi 0, %s66
    %s86 = sphi 0, %s86
    %s88 = sphi 0, %s86
    %s89 = sphi 0, %s88
    %s103 = sphi 0, %s89
    %s107 = sphi 0, %s107
    %s109 = sphi 0, %s107
    %s110 = sphi 0, %s109
    %s124 = sphi 0, %s110
    %s132 = sphi 0, %s134
    %s135 = sphi 0, %s132
    %s136 = sphi 0, %s135
    %s152 = sphi 0, %s136
  $region4: #{resblock_forward.9} parent=0 // loop_header_branch
    %13 = sbr.rel (%p11) target = $region8
  $region5: #{resblock_forward.9} parent=0 // loop_body
    %s15 = ssub.s32 %s10, 1
    %s16 = ssub.s32 %s10, 2
    %s23 = sadd.s32 1, %s18
    %p24 = scmp.ge.s32.totalorder %s23, 2
    %s25 = scalar_select %p24, 0, %s23
    %s26 = sadd.s32 1, %s17
    %s27 = scalar_select %p24, %s26, %s17
    %p28 = scmp.ge.s32.totalorder %s27, 2
    %s29 = scalar_select %p28, 0, %s27
    %s30 = ssub.s32 %s17, %s29
    %s31 = ssub.s32 %s18, %s25
    %s32 = sor.u32 %s30, %s31
    %p33 = scmp.eq.s32.totalorder %s32, 0
    %s35 = sadd.s32 %s34, 1
    %s36 = scalar_select %p33, %s34, %s35
    %p39 = pneg %p33
    %p40 = scmp.eq.s32.totalorder %s10, 3
    %p41 = por %p39, %p40
    %p42 = scmp.ne.s32.totalorder %s34, %s37
    %p43 = scmp.eq.s32.totalorder %s10, 0
    %p44 = por %p42, %p43
    %p45 = scmp.ne.s32.totalorder %s34, %s37
    %p46 = scmp.eq.s32.totalorder %s15, 3
    %p47 = por %p45, %p46
    %p48 = scmp.ne.s32.totalorder %s37, %s38
    %p49 = scmp.eq.s32.totalorder %s15, 0
    %p50 = por %p48, %p49
    %p51 = scmp.ne.s32.totalorder %s37, %s38
    %p52 = scmp.eq.s32.totalorder %s16, 3
    %p53 = por %p51, %p52
    %p55 = scmp.ne.s32.totalorder %s38, %s54
    %p56 = scmp.eq.s32.totalorder %s16, 0
    %p57 = por %p55, %p56
    %s58 = ssub.s32 %s17, %s29
    %s59 = ssub.s32 %s18, %s25
    %s60 = sor.u32 %s58, %s59
    %p61 = scmp.eq.s32.totalorder %s60, 0
    %s63 = sadd.s32 %s62, 1
    %s64 = scalar_select %p61, %s62, %s63
    %p67 = pneg %p61
    %p68 = scmp.eq.s32.totalorder %s10, 3
    %p69 = por %p67, %p68
    %p70 = scmp.ne.s32.totalorder %s62, %s65
    %p71 = scmp.eq.s32.totalorder %s10, 0
    %p72 = por %p70, %p71
    %p73 = scmp.ne.s32.totalorder %s62, %s65
    %p74 = scmp.eq.s32.totalorder %s15, 3
    %p75 = por %p73, %p74
    %p76 = scmp.ne.s32.totalorder %s65, %s66
    %p77 = scmp.eq.s32.totalorder %s15, 0
    %p78 = por %p76, %p77
    %p79 = scmp.ne.s32.totalorder %s65, %s66
    %p80 = scmp.eq.s32.totalorder %s16, 3
    %p81 = por %p79, %p80
    %p83 = scmp.ne.s32.totalorder %s66, %s82
    %p84 = scmp.eq.s32.totalorder %s16, 0
    %p85 = por %p83, %p84
    %s87 = sadd.s32 %s86, 1
    %p90 = scmp.eq.s32.totalorder %s10, 3
    %p91 = scmp.ne.s32.totalorder %s86, %s88
    %p92 = scmp.eq.s32.totalorder %s10, 0
    %p93 = por %p91, %p92
    %p94 = scmp.ne.s32.totalorder %s86, %s88
    %p95 = scmp.eq.s32.totalorder %s15, 3
    %p96 = por %p94, %p95
    %p97 = scmp.ne.s32.totalorder %s88, %s89
    %p98 = scmp.eq.s32.totalorder %s15, 0
    %p99 = por %p97, %p98
    %p100 = scmp.ne.s32.totalorder %s88, %s89
    %p101 = scmp.eq.s32.totalorder %s16, 3
    %p102 = por %p100, %p101
    %p104 = scmp.ne.s32.totalorder %s89, %s103
    %p105 = scmp.eq.s32.totalorder %s16, 0
    %p106 = por %p104, %p105
    %s108 = sadd.s32 %s107, 1
    %p111 = scmp.eq.s32.totalorder %s10, 3
    %p112 = scmp.ne.s32.totalorder %s107, %s109
    %p113 = scmp.eq.s32.totalorder %s10, 0
    %p114 = por %p112, %p113
    %p115 = scmp.ne.s32.totalorder %s107, %s109
    %p116 = scmp.eq.s32.totalorder %s15, 3
    %p117 = por %p115, %p116
    %p118 = scmp.ne.s32.totalorder %s109, %s110
    %p119 = scmp.eq.s32.totalorder %s15, 0
    %p120 = por %p118, %p119
    %p121 = scmp.ne.s32.totalorder %s109, %s110
    %p122 = scmp.eq.s32.totalorder %s16, 3
    %p123 = por %p121, %p122
    %p125 = scmp.ne.s32.totalorder %s110, %s124
    %p126 = scmp.eq.s32.totalorder %s16, 0
    %p127 = por %p125, %p126
    %s128 = ssub.s32 %s17, %s29
    %s129 = ssub.s32 %s18, %s25
    %s130 = sor.u32 %s128, %s129
    %p131 = scmp.eq.s32.totalorder %s130, 0
    %s133 = sadd.s32 %s132, 1
    %s134 = scalar_select %p131, %s132, %s133
    %p137 = pneg %p131
    %p138 = scmp.eq.s32.totalorder %s10, 3
    %p139 = por %p137, %p138
    %p140 = scmp.ne.s32.totalorder %s132, %s135
    %p141 = scmp.eq.s32.totalorder %s10, 0
    %p142 = por %p140, %p141
    %p143 = scmp.ne.s32.totalorder %s132, %s135
    %p144 = scmp.eq.s32.totalorder %s15, 3
    %p145 = por %p143, %p144
    %p146 = scmp.ne.s32.totalorder %s135, %s136
    %p147 = scmp.eq.s32.totalorder %s15, 0
    %p148 = por %p146, %p147
    %p149 = scmp.ne.s32.totalorder %s135, %s136
    %p150 = scmp.eq.s32.totalorder %s16, 3
    %p151 = por %p149, %p150
    %p153 = scmp.ne.s32.totalorder %s136, %s152
    %p154 = scmp.eq.s32.totalorder %s16, 0
    %p155 = por %p153, %p154
    %p156 = scmp.le.s32.totalorder 1, %s10
    %p157 = scmp.lt.s32.totalorder %s10, 5
    %p158 = pnand %p156, %p157
    %p159 = pneg %p158
    // Predicated region
    $region9: #{resblock_forward.9} parent=5 // pred_check
      _
    $region10: #{resblock_forward.9} parent=5 // pred_check_branch
      %161 = sbr.rel (%p158) target = $region12
    $region11: #{resblock_forward.9} parent=5 // pred_region
      %s162 = ssub.s32 %s10, 1
      // Predicated region
      $region13: #{resblock_forward.9} parent=11 // pred_check
        %p163 = pneg %p99
      $region14: #{resblock_forward.9} parent=11 // pred_check_branch
        %165 = sbr.rel (%p163) target = $region16
      $region15: #{resblock_forward.9} parent=11 // pred_region
        _
      $region16: #{resblock_forward.9} parent=11 // pred_fallthru
        _
      // Predicated region
      $region17: #{resblock_forward.9} parent=11 // pred_check
        %p166 = pneg %p120
      $region18: #{resblock_forward.9} parent=11 // pred_check_branch
        %168 = sbr.rel (%p166) target = $region20
      $region19: #{resblock_forward.9} parent=11 // pred_region
        _
      $region20: #{resblock_forward.9} parent=11 // pred_fallthru
        _
    $region12: #{resblock_forward.9} parent=5 // pred_fallthru
      _
    %p169 = scmp.lt.s32.totalorder %s10, 4
    // Predicated region
    $region21: #{resblock_forward.9} parent=5 // pred_check
      %p170 = pneg %p169
    $region22: #{resblock_forward.9} parent=5 // pred_check_branch
      %172 = sbr.rel (%p170) target = $region24
    $region23: #{resblock_forward.9} parent=5 // pred_region
      // Predicated region
      $region25: #{resblock_forward.9} parent=23 // pred_check
        %p173 = pneg %p44
      $region26: #{resblock_forward.9} parent=23 // pred_check_branch
        %175 = sbr.rel (%p173) target = $region28
      $region27: #{resblock_forward.9} parent=23 // pred_region
        %s176 = smul.u32 4, %s18
        %p177 = scmp.lt.s32.totalorder %s17, 1
        %s178 = scalar_select %p177, %s17, 1
        %p179 = scmp.lt.s32.totalorder %s176, 7
        %s180 = scalar_select %p179, %s176, 7
        %s181 = smul.addr %s178, 8
        %s182 = sadd.s32 %s180, %s181
        %s183 = smul.addr %s182, 4
        %s184 = scalar_lea.vmem %s0, %s183
        %s185 = smul.u32 4, %s18
      $region28: #{resblock_forward.9} parent=23 // pred_fallthru
        _
      // Predicated region
      $region29: #{resblock_forward.9} parent=23 // pred_check
        %p186 = pneg %p72
      $region30: #{resblock_forward.9} parent=23 // pred_check_branch
        %188 = sbr.rel (%p186) target = $region32
      $region31: #{resblock_forward.9} parent=23 // pred_region
        %s189 = smul.u32 4, %s18
        %p190 = scmp.lt.s32.totalorder %s17, 1
        %s191 = scalar_select %p190, %s17, 1
        %p192 = scmp.lt.s32.totalorder %s189, 7
        %s193 = scalar_select %p192, %s189, 7
        %s194 = smul.addr %s191, 8
        %s195 = sadd.s32 %s193, %s194
        %s196 = smul.addr %s195, 4
        %s197 = scalar_lea.vmem %s1, %s196
        %s198 = smul.u32 4, %s18
      $region32: #{resblock_forward.9} parent=23 // pred_fallthru
        _
    $region24: #{resblock_forward.9} parent=5 // pred_fallthru
      _
    %p199 = scmp.le.s32.totalorder 1, %s10
    %p200 = scmp.lt.s32.totalorder %s10, 5
    %p201 = pnand %p199, %p200
    %p202 = pneg %p201
    // Predicated region
    $region33: #{resblock_forward.9} parent=5 // pred_check
      _
    $region34: #{resblock_forward.9} parent=5 // pred_check_branch
      %204 = sbr.rel (%p201) target = $region36
    $region35: #{resblock_forward.9} parent=5 // pred_region
      %s205 = ssub.s32 %s10, 1
      %s206 = smul.u32 4, %s20
      %p207 = scmp.lt.s32.totalorder %s19, 1
      %s208 = scalar_select %p207, %s19, 1
      %p209 = scmp.lt.s32.totalorder %s206, 7
      %s210 = scalar_select %p209, %s206, 7
      %s211 = smul.addr %s208, 8
      %s212 = sadd.s32 %s210, %s211
      %s213 = smul.addr %s212, 4
      %s214 = scalar_lea.vmem %s0, %s213
      %p215 = pneg %p50
      %p216 = pneg %p47
      %s217 = smul.u32 4, %s20
      %p218 = scmp.lt.s32.totalorder %s19, 1
      %s219 = scalar_select %p218, %s19, 1
      %p220 = scmp.lt.s32.totalorder %s217, 7
      %s221 = scalar_select %p220, %s217, 7
      %s222 = smul.addr %s219, 8
      %s223 = sadd.s32 %s221, %s222
      %s224 = smul.addr %s223, 4
      %s225 = scalar_lea.vmem %s1, %s224
      %p226 = pneg %p78
      %p227 = pneg %p75
      %p228 = pneg %p99
      %p229 = pneg %p96
      %p230 = pneg %p120
      %p231 = pneg %p117
      %p232 = pneg %p148
      %p233 = pneg %p145
      %s234 = smul.u32 4, %s20
      %p235 = scmp.lt.s32.totalorder %s19, 1
      %s236 = scalar_select %p235, %s19, 1
      %p237 = scmp.lt.s32.totalorder %s234, 7
      %s238 = scalar_select %p237, %s234, 7
      %s239 = smul.addr %s236, 8
      %s240 = sadd.s32 %s238, %s239
      %s241 = smul.addr %s240, 8
      %s242 = scalar_lea.vmem %s4, %s241
      %s243 = smul.u32 4, %s20
      %p244 = scmp.lt.s32.totalorder %s19, 1
      %s245 = scalar_select %p244, %s19, 1
      %p246 = scmp.lt.s32.totalorder %s243, 7
      %s247 = scalar_select %p246, %s243, 7
      %s248 = smul.addr %s245, 8
      %s249 = sadd.s32 %s247, %s248
      %s250 = smul.addr %s249, 4
      %s251 = scalar_lea.vmem %s0, %s250
      %s252 = smul.u32 4, %s20
      %s253 = smul.u32 4, %s20
      %p254 = scmp.lt.s32.totalorder %s19, 1
      %s255 = scalar_select %p254, %s19, 1
      %p256 = scmp.lt.s32.totalorder %s253, 7
      %s257 = scalar_select %p256, %s253, 7
      %s258 = smul.addr %s255, 8
      %s259 = sadd.s32 %s257, %s258
      %s260 = smul.addr %s259, 4
      %s261 = scalar_lea.vmem %s1, %s260
      %s262 = smul.u32 4, %s20
      %s263 = smul.u32 4, %s20
      %p264 = scmp.lt.s32.totalorder %s19, 1
      %s265 = scalar_select %p264, %s19, 1
      %p266 = scmp.lt.s32.totalorder %s263, 7
      %s267 = scalar_select %p266, %s263, 7
      %s268 = smul.addr %s265, 8
      %s269 = sadd.s32 %s267, %s268
      %s270 = smul.addr %s269, 8
      %s271 = scalar_lea.vmem %s4, %s270
      %s272 = smul.u32 4, %s20
      %v273 = vld [vmem:[%s251] sm:$0xf]
      %v274 = vld [vmem:[%s251 + $0x4] sm:$0xf]
      %v275 = vld [vmem:[%s251 + $0x8] sm:$0xf]
      %v276 = vld [vmem:[%s251 + $0xc] sm:$0xf]
      %v277 = vunpack.c.l.bf16 %v273
      %v278 = vunpack.c.l.bf16 %v274
      %v279 = vunpack.c.l.bf16 %v275
      %v280 = vunpack.c.l.bf16 %v276
      %v281 = vld [vmem:[%s261] sm:$0xf]
      %v282 = vld [vmem:[%s261 + $0x4] sm:$0xf]
      %v283 = vld [vmem:[%s261 + $0x8] sm:$0xf]
      %v284 = vld [vmem:[%s261 + $0xc] sm:$0xf]
      %v285 = vunpack.c.l.bf16 %v281
      %v286 = vunpack.c.l.bf16 %v282
      %v287 = vunpack.c.l.bf16 %v283
      %v288 = vunpack.c.l.bf16 %v284
      %v289 = vld [vmem:[%s2] sm:$0x1]
      %v291 = vperm.slane %v289, 0
      %v293 = vmul.f32 %v277, %v291
      %v294 = vmul.f32 %v278, %v291
      %v295 = vmul.f32 %v279, %v291
      %v296 = vmul.f32 %v280, %v291
      %v297 = vadd.f32 %v285, %v293
      %v298 = vadd.f32 %v286, %v294
      %v299 = vadd.f32 %v287, %v295
      %v300 = vadd.f32 %v288, %v296
      %v301 = vld [vmem:[%s3] sm:$0x1]
      %v303 = vperm.slane %v301, 0
      %v305 = vadd.f32 %v297, %v303
      %v306 = vadd.f32 %v298, %v303
      %v307 = vadd.f32 %v299, %v303
      %v308 = vadd.f32 %v300, %v303
      %v309 = vmax.f32 %v305, 0.0
      %v310 = vmax.f32 %v306, 0.0
      %v311 = vmax.f32 %v307, 0.0
      %v312 = vmax.f32 %v308, 0.0
      %313 = vst [vmem:[%s271] sm:$0xff] %v309
      %314 = vst [vmem:[%s271 + $0x8] sm:$0xff] %v310
      %315 = vst [vmem:[%s271 + $0x10] sm:$0xff] %v311
      %316 = vst [vmem:[%s271 + $0x18] sm:$0xff] %v312
      %s317 = smul.u32 4, %s20
      %p318 = scmp.lt.s32.totalorder %s19, 1
      %s319 = scalar_select %p318, %s19, 1
      %p320 = scmp.lt.s32.totalorder %s317, 7
      %s321 = scalar_select %p320, %s317, 7
      %s322 = smul.addr %s319, 8
      %s323 = sadd.s32 %s321, %s322
      %s324 = smul.addr %s323, 8
      %s325 = scalar_lea.vmem %s4, %s324
      // Predicated region
      $region37: #{resblock_forward.9} parent=35 // pred_check
        %p326 = pneg %p145
      $region38: #{resblock_forward.9} parent=35 // pred_check_branch
        %328 = sbr.rel (%p326) target = $region40
      $region39: #{resblock_forward.9} parent=35 // pred_region
        %s329 = smul.u32 4, %s20
      $region40: #{resblock_forward.9} parent=35 // pred_fallthru
        _
    $region36: #{resblock_forward.9} parent=5 // pred_fallthru
      _
    %p330 = scmp.le.s32.totalorder 2, %s10
    // Predicated region
    $region41: #{resblock_forward.9} parent=5 // pred_check
      %p331 = pneg %p330
    $region42: #{resblock_forward.9} parent=5 // pred_check_branch
      %333 = sbr.rel (%p331) target = $region44
    $region43: #{resblock_forward.9} parent=5 // pred_region
      %s334 = ssub.s32 %s10, 2
      // Predicated region
      $region45: #{resblock_forward.9} parent=43 // pred_check
        %p335 = pneg %p151
      $region46: #{resblock_forward.9} parent=43 // pred_check_branch
        %337 = sbr.rel (%p335) target = $region48
      $region47: #{resblock_forward.9} parent=43 // pred_region
        %s338 = smul.u32 4, %s22
        %p339 = scmp.lt.s32.totalorder %s21, 1
        %s340 = scalar_select %p339, %s21, 1
        %p341 = scmp.lt.s32.totalorder %s338, 7
        %s342 = scalar_select %p341, %s338, 7
        %s343 = smul.addr %s340, 8
        %s344 = sadd.s32 %s342, %s343
        %s345 = smul.addr %s344, 8
        %s346 = scalar_lea.vmem %s4, %s345
      $region48: #{resblock_forward.9} parent=43 // pred_fallthru
        _
    $region44: #{resblock_forward.9} parent=5 // pred_fallthru
      _
  $region6: #{resblock_forward.9} parent=0 // loop_footer
    %s14 = sadd.s32 1, %s10
  $region7: #{resblock_forward.9} parent=0 // loop_footer_branch
    %9 = sbr.rel target = $region3
  $region8: #{resblock_forward.9} parent=0 // loop_exit
    _

// kernel: resblock_forward.6
$region0: #{resblock_forward.6}
  #allocation0 [shape = 'u32[]', space=smem, size = 0x4, offset = 0x4, fixed_abs, tag = 'smem constant byte address 0x4 - core index']
  #allocation1 [shape = 'u32[72,128]{1,0:T(1,128)}', space=vmem, size = 0x9000, scoped, tag = 'internal scratch']
  %s0 = inlined_call_operand.vmem [shape: bf16[2,10,10,128], index: 0, kind: input, shape index: {}, may-alias: {0,1,2}]
  %s1 = inlined_call_operand.vmem [shape: bf16[2,10,10,128], index: 1, kind: input, shape index: {}, may-alias: {0,1,2}]
  %s2 = inlined_call_operand.vmem [shape: bf16[2,10,10,128], index: 2, kind: input, shape index: {}, may-alias: {0,1,2}]
  %s3 = inlined_call_operand.vmem [shape: bf16[9,128,128], index: 3, kind: input, shape index: {}]
  %s4 = inlined_call_operand.vmem [shape: bf16[2,8,8,128], index: 4, kind: output, shape index: {0}]
  %s5 = inlined_call_operand.vmem [shape: f32[2,2,8,128], index: 5, kind: output, shape index: {1}]
  %s6 = inlined_call_operand.vmem [shape: f32[2,2,8,128], index: 6, kind: output, shape index: {2}]
  %7 = xla_tuple %s4, %s5, %s6
  %s8 = sld [smem:[#allocation0]]
  $region65: #{resblock_forward.6} parent=0
    _
  %s10 = ssub.s32 1, %s8
  %s11 = scalar_select 0, %s10, %s8
  loop: start=0, step=1, limit=6
  $region2: #{resblock_forward.6} parent=0 // loop_pre_header
    _
  $region3: #{resblock_forward.6} parent=0 // loop_header
    %s13 = sphi 0, %s17
    %p14 = scmp.ge.s32.totalorder %s13, 6
    %s20 = sphi 0, %s32
    %s21 = sphi 0, %s28
    %s22 = sphi 0, %s20
    %s23 = sphi 0, %s21
    %s24 = sphi 0, %s22
    %s25 = sphi 0, %s23
    %s37 = sphi 0, %s39
    %s40 = sphi 0, %s37
    %s41 = sphi 0, %s40
    %s57 = sphi 0, %s41
    %s69 = sphi 0, %s71
    %s72 = sphi 0, %s69
    %s73 = sphi 0, %s72
    %s89 = sphi 0, %s73
    %s101 = sphi 0, %s103
    %s104 = sphi 0, %s101
    %s105 = sphi 0, %s104
    %s121 = sphi 0, %s105
    %s125 = sphi 0, %s125
    %s127 = sphi 0, %s125
    %s128 = sphi 0, %s127
    %s142 = sphi 0, %s128
    %s150 = sphi 0, %s152
    %s153 = sphi 0, %s150
    %s154 = sphi 0, %s153
    %s170 = sphi 0, %s154
    %s178 = sphi 0, %s180
    %s181 = sphi 0, %s178
    %s182 = sphi 0, %s181
    %s198 = sphi 0, %s182
    %s206 = sphi 0, %s208
    %s209 = sphi 0, %s206
    %s210 = sphi 0, %s209
    %s226 = sphi 0, %s210
  $region4: #{resblock_forward.6} parent=0 // loop_header_branch
    %16 = sbr.rel (%p14) target = $region8
  $region5: #{resblock_forward.6} parent=0 // loop_body
    %s18 = ssub.s32 %s13, 1
    %s19 = ssub.s32 %s13, 2
    %s26 = sadd.s32 1, %s21
    %p27 = scmp.ge.s32.totalorder %s26, 2
    %s28 = scalar_select %p27, 0, %s26
    %s29 = sadd.s32 1, %s20
    %s30 = scalar_select %p27, %s29, %s20
    %p31 = scmp.ge.s32.totalorder %s30, 2
    %s32 = scalar_select %p31, 0, %s30
    %s33 = ssub.s32 %s20, %s32
    %s34 = ssub.s32 %s21, %s28
    %s35 = sor.u32 %s33, %s34
    %p36 = scmp.eq.s32.totalorder %s35, 0
    %s38 = sadd.s32 %s37, 1
    %s39 = scalar_select %p36, %s37, %s38
    %p42 = pneg %p36
    %p43 = scmp.eq.s32.totalorder %s13, 3
    %p44 = por %p42, %p43
    %p45 = scmp.ne.s32.totalorder %s37, %s40
    %p46 = scmp.eq.s32.totalorder %s13, 0
    %p47 = por %p45, %p46
    %p48 = scmp.ne.s32.totalorder %s37, %s40
    %p49 = scmp.eq.s32.totalorder %s18, 3
    %p50 = por %p48, %p49
    %p51 = scmp.ne.s32.totalorder %s40, %s41
    %p52 = scmp.eq.s32.totalorder %s18, 0
    %p53 = por %p51, %p52
    %p54 = scmp.ne.s32.totalorder %s40, %s41
    %p55 = scmp.eq.s32.totalorder %s19, 3
    %p56 = por %p54, %p55
    %p58 = scmp.ne.s32.totalorder %s41, %s57
    %p59 = scmp.eq.s32.totalorder %s19, 0
    %p60 = por %p58, %p59
    %s61 = smul.u32 %s21, 4
    %s62 = sadd.s32 %s61, 4
    %s63 = smul.u32 %s28, 4
    %s64 = sadd.s32 %s63, 4
    %s65 = ssub.s32 %s20, %s32
    %s66 = ssub.s32 %s62, %s64
    %s67 = sor.u32 %s65, %s66
    %p68 = scmp.eq.s32.totalorder %s67, 0
    %s70 = sadd.s32 %s69, 1
    %s71 = scalar_select %p68, %s69, %s70
    %p74 = pneg %p68
    %p75 = scmp.eq.s32.totalorder %s13, 3
    %p76 = por %p74, %p75
    %p77 = scmp.ne.s32.totalorder %s69, %s72
    %p78 = scmp.eq.s32.totalorder %s13, 0
    %p79 = por %p77, %p78
    %p80 = scmp.ne.s32.totalorder %s69, %s72
    %p81 = scmp.eq.s32.totalorder %s18, 3
    %p82 = por %p80, %p81
    %p83 = scmp.ne.s32.totalorder %s72, %s73
    %p84 = scmp.eq.s32.totalorder %s18, 0
    %p85 = por %p83, %p84
    %p86 = scmp.ne.s32.totalorder %s72, %s73
    %p87 = scmp.eq.s32.totalorder %s19, 3
    %p88 = por %p86, %p87
    %p90 = scmp.ne.s32.totalorder %s73, %s89
    %p91 = scmp.eq.s32.totalorder %s19, 0
    %p92 = por %p90, %p91
    %s93 = smul.u32 %s21, 4
    %s94 = sadd.s32 %s93, 5
    %s95 = smul.u32 %s28, 4
    %s96 = sadd.s32 %s95, 5
    %s97 = ssub.s32 %s20, %s32
    %s98 = ssub.s32 %s94, %s96
    %s99 = sor.u32 %s97, %s98
    %p100 = scmp.eq.s32.totalorder %s99, 0
    %s102 = sadd.s32 %s101, 1
    %s103 = scalar_select %p100, %s101, %s102
    %p106 = pneg %p100
    %p107 = scmp.eq.s32.totalorder %s13, 3
    %p108 = por %p106, %p107
    %p109 = scmp.ne.s32.totalorder %s101, %s104
    %p110 = scmp.eq.s32.totalorder %s13, 0
    %p111 = por %p109, %p110
    %p112 = scmp.ne.s32.totalorder %s101, %s104
    %p113 = scmp.eq.s32.totalorder %s18, 3
    %p114 = por %p112, %p113
    %p115 = scmp.ne.s32.totalorder %s104, %s105
    %p116 = scmp.eq.s32.totalorder %s18, 0
    %p117 = por %p115, %p116
    %p118 = scmp.ne.s32.totalorder %s104, %s105
    %p119 = scmp.eq.s32.totalorder %s19, 3
    %p120 = por %p118, %p119
    %p122 = scmp.ne.s32.totalorder %s105, %s121
    %p123 = scmp.eq.s32.totalorder %s19, 0
    %p124 = por %p122, %p123
    %s126 = sadd.s32 %s125, 1
    %p129 = scmp.eq.s32.totalorder %s13, 3
    %p130 = scmp.ne.s32.totalorder %s125, %s127
    %p131 = scmp.eq.s32.totalorder %s13, 0
    %p132 = por %p130, %p131
    %p133 = scmp.ne.s32.totalorder %s125, %s127
    %p134 = scmp.eq.s32.totalorder %s18, 3
    %p135 = por %p133, %p134
    %p136 = scmp.ne.s32.totalorder %s127, %s128
    %p137 = scmp.eq.s32.totalorder %s18, 0
    %p138 = por %p136, %p137
    %p139 = scmp.ne.s32.totalorder %s127, %s128
    %p140 = scmp.eq.s32.totalorder %s19, 3
    %p141 = por %p139, %p140
    %p143 = scmp.ne.s32.totalorder %s128, %s142
    %p144 = scmp.eq.s32.totalorder %s19, 0
    %p145 = por %p143, %p144
    %s146 = ssub.s32 %s20, %s32
    %s147 = ssub.s32 %s21, %s28
    %s148 = sor.u32 %s146, %s147
    %p149 = scmp.eq.s32.totalorder %s148, 0
    %s151 = sadd.s32 %s150, 1
    %s152 = scalar_select %p149, %s150, %s151
    %p155 = pneg %p149
    %p156 = scmp.eq.s32.totalorder %s13, 3
    %p157 = por %p155, %p156
    %p158 = scmp.ne.s32.totalorder %s150, %s153
    %p159 = scmp.eq.s32.totalorder %s13, 0
    %p160 = por %p158, %p159
    %p161 = scmp.ne.s32.totalorder %s150, %s153
    %p162 = scmp.eq.s32.totalorder %s18, 3
    %p163 = por %p161, %p162
    %p164 = scmp.ne.s32.totalorder %s153, %s154
    %p165 = scmp.eq.s32.totalorder %s18, 0
    %p166 = por %p164, %p165
    %p167 = scmp.ne.s32.totalorder %s153, %s154
    %p168 = scmp.eq.s32.totalorder %s19, 3
    %p169 = por %p167, %p168
    %p171 = scmp.ne.s32.totalorder %s154, %s170
    %p172 = scmp.eq.s32.totalorder %s19, 0
    %p173 = por %p171, %p172
    %s174 = ssub.s32 %s20, %s32
    %s175 = ssub.s32 %s21, %s28
    %s176 = sor.u32 %s174, %s175
    %p177 = scmp.eq.s32.totalorder %s176, 0
    %s179 = sadd.s32 %s178, 1
    %s180 = scalar_select %p177, %s178, %s179
    %p183 = pneg %p177
    %p184 = scmp.eq.s32.totalorder %s13, 3
    %p185 = por %p183, %p184
    %p186 = scmp.ne.s32.totalorder %s178, %s181
    %p187 = scmp.eq.s32.totalorder %s13, 0
    %p188 = por %p186, %p187
    %p189 = scmp.ne.s32.totalorder %s178, %s181
    %p190 = scmp.eq.s32.totalorder %s18, 3
    %p191 = por %p189, %p190
    %p192 = scmp.ne.s32.totalorder %s181, %s182
    %p193 = scmp.eq.s32.totalorder %s18, 0
    %p194 = por %p192, %p193
    %p195 = scmp.ne.s32.totalorder %s181, %s182
    %p196 = scmp.eq.s32.totalorder %s19, 3
    %p197 = por %p195, %p196
    %p199 = scmp.ne.s32.totalorder %s182, %s198
    %p200 = scmp.eq.s32.totalorder %s19, 0
    %p201 = por %p199, %p200
    %s202 = ssub.s32 %s20, %s32
    %s203 = ssub.s32 %s21, %s28
    %s204 = sor.u32 %s202, %s203
    %p205 = scmp.eq.s32.totalorder %s204, 0
    %s207 = sadd.s32 %s206, 1
    %s208 = scalar_select %p205, %s206, %s207
    %p211 = pneg %p205
    %p212 = scmp.eq.s32.totalorder %s13, 3
    %p213 = por %p211, %p212
    %p214 = scmp.ne.s32.totalorder %s206, %s209
    %p215 = scmp.eq.s32.totalorder %s13, 0
    %p216 = por %p214, %p215
    %p217 = scmp.ne.s32.totalorder %s206, %s209
    %p218 = scmp.eq.s32.totalorder %s18, 3
    %p219 = por %p217, %p218
    %p220 = scmp.ne.s32.totalorder %s209, %s210
    %p221 = scmp.eq.s32.totalorder %s18, 0
    %p222 = por %p220, %p221
    %p223 = scmp.ne.s32.totalorder %s209, %s210
    %p224 = scmp.eq.s32.totalorder %s19, 3
    %p225 = por %p223, %p224
    %p227 = scmp.ne.s32.totalorder %s210, %s226
    %p228 = scmp.eq.s32.totalorder %s19, 0
    %p229 = por %p227, %p228
    %p230 = scmp.le.s32.totalorder 1, %s13
    %p231 = scmp.lt.s32.totalorder %s13, 5
    %p232 = pnand %p230, %p231
    %p233 = pneg %p232
    // Predicated region
    $region9: #{resblock_forward.6} parent=5 // pred_check
      _
    $region10: #{resblock_forward.6} parent=5 // pred_check_branch
      %235 = sbr.rel (%p232) target = $region12
    $region11: #{resblock_forward.6} parent=5 // pred_region
      %s236 = ssub.s32 %s13, 1
      // Predicated region
      $region13: #{resblock_forward.6} parent=11 // pred_check
        %p237 = pneg %p138
      $region14: #{resblock_forward.6} parent=11 // pred_check_branch
        %239 = sbr.rel (%p237) target = $region16
      $region15: #{resblock_forward.6} parent=11 // pred_region
        _
      $region16: #{resblock_forward.6} parent=11 // pred_fallthru
        _
    $region12: #{resblock_forward.6} parent=5 // pred_fallthru
      _
    %p240 = scmp.lt.s32.totalorder %s13, 4
    // Predicated region
    $region17: #{resblock_forward.6} parent=5 // pred_check
      %p241 = pneg %p240
    $region18: #{resblock_forward.6} parent=5 // pred_check_branch
      %243 = sbr.rel (%p241) target = $region20
    $region19: #{resblock_forward.6} parent=5 // pred_region
      // Predicated region
      $region21: #{resblock_forward.6} parent=19 // pred_check
        %p244 = pneg %p47
      $region22: #{resblock_forward.6} parent=19 // pred_check_branch
        %246 = sbr.rel (%p244) target = $region24
      $region23: #{resblock_forward.6} parent=19 // pred_region
        %s247 = smul.u32 4, %s21
        %s248 = ssub.s32 10, %s247
        %p249 = scmp.lt.s32.totalorder %s248, 4
        %s250 = scalar_select %p249, %s248, 4
        %s251 = smul.u32 4, %s250
        %s252 = smul.u32 %s251, 2
        %p253 = scmp.lt.s32.totalorder %s20, 1
        %s254 = scalar_select %p253, %s20, 1
        %p255 = scmp.lt.s32.totalorder %s247, 9
        %s256 = scalar_select %p255, %s247, 9
        %s257 = smul.addr %s256, 2
        %s258 = smul.addr %s254, 20
        %s259 = sadd.s32 %s257, %s258
        %s260 = smul.addr %s259, 4
        %s261 = scalar_lea.vmem %s0, %s260
        %s262 = smul.u32 4, %s21
        %s263 = ssub.s32 10, %s262
        %p264 = scmp.lt.s32.totalorder %s263, 4
        %s265 = scalar_select %p264, %s263, 4
        %s266 = smul.u32 4, %s265
        %s267 = smul.u32 %s266, 2
      $region24: #{resblock_forward.6} parent=19 // pred_fallthru
        _
      // Predicated region
      $region25: #{resblock_forward.6} parent=19 // pred_check
        %p268 = pneg %p79
      $region26: #{resblock_forward.6} parent=19 // pred_check_branch
        %270 = sbr.rel (%p268) target = $region28
      $region27: #{resblock_forward.6} parent=19 // pred_region
        %s271 = smul.u32 %s21, 4
        %s272 = sadd.s32 %s271, 4
        %p273 = scmp.lt.s32.totalorder %s20, 1
        %s274 = scalar_select %p273, %s20, 1
        %p275 = scmp.lt.s32.totalorder %s272, 9
        %s276 = scalar_select %p275, %s272, 9
        %s277 = smul.addr %s276, 2
        %s278 = smul.addr %s274, 20
        %s279 = sadd.s32 %s277, %s278
        %s280 = smul.addr %s279, 4
        %s281 = scalar_lea.vmem %s1, %s280
        %s282 = smul.u32 %s21, 4
        %s283 = sadd.s32 %s282, 4
      $region28: #{resblock_forward.6} parent=19 // pred_fallthru
        _
      // Predicated region
      $region29: #{resblock_forward.6} parent=19 // pred_check
        %p284 = pneg %p111
      $region30: #{resblock_forward.6} parent=19 // pred_check_branch
        %286 = sbr.rel (%p284) target = $region32
      $region31: #{resblock_forward.6} parent=19 // pred_region
        %s287 = smul.u32 %s21, 4
        %s288 = sadd.s32 %s287, 5
        %p289 = scmp.lt.s32.totalorder %s20, 1
        %s290 = scalar_select %p289, %s20, 1
        %p291 = scmp.lt.s32.totalorder %s288, 9
        %s292 = scalar_select %p291, %s288, 9
        %s293 = smul.addr %s292, 2
        %s294 = smul.addr %s290, 20
        %s295 = sadd.s32 %s293, %s294
        %s296 = smul.addr %s295, 4
        %s297 = scalar_lea.vmem %s2, %s296
        %s298 = smul.u32 %s21, 4
        %s299 = sadd.s32 %s298, 5
      $region32: #{resblock_forward.6} parent=19 // pred_fallthru
        _
    $region20: #{resblock_forward.6} parent=5 // pred_fallthru
      _
    %p300 = scmp.le.s32.totalorder 1, %s13
    %p301 = scmp.lt.s32.totalorder %s13, 5
    %p302 = pnand %p300, %p301
    %p303 = pneg %p302
    // Predicated region
    $region33: #{resblock_forward.6} parent=5 // pred_check
      _
    $region34: #{resblock_forward.6} parent=5 // pred_check_branch
      %305 = sbr.rel (%p302) target = $region36
    $region35: #{resblock_forward.6} parent=5 // pred_region
      %s306 = ssub.s32 %s13, 1
      %s307 = smul.u32 4, %s23
      %s308 = ssub.s32 10, %s307
      %p309 = scmp.lt.s32.totalorder %s308, 4
      %s310 = scalar_select %p309, %s308, 4
      %s311 = smul.u32 4, %s310
      %s312 = smul.u32 %s311, 2
      %p313 = scmp.lt.s32.totalorder %s22, 1
      %s314 = scalar_select %p313, %s22, 1
      %p315 = scmp.lt.s32.totalorder %s307, 9
      %s316 = scalar_select %p315, %s307, 9
      %s317 = smul.addr %s316, 2
      %s318 = smul.addr %s314, 20
      %s319 = sadd.s32 %s317, %s318
      %s320 = smul.addr %s319, 4
      %s321 = scalar_lea.vmem %s0, %s320
      %p322 = pneg %p53
      %p323 = pneg %p50
      %s324 = smul.u32 %s23, 4
      %s325 = sadd.s32 %s324, 4
      %p326 = scmp.lt.s32.totalorder %s22, 1
      %s327 = scalar_select %p326, %s22, 1
      %p328 = scmp.lt.s32.totalorder %s325, 9
      %s329 = scalar_select %p328, %s325, 9
      %s330 = smul.addr %s329, 2
      %s331 = smul.addr %s327, 20
      %s332 = sadd.s32 %s330, %s331
      %s333 = smul.addr %s332, 4
      %s334 = scalar_lea.vmem %s1, %s333
      %p335 = pneg %p85
      %p336 = pneg %p82
      %s337 = smul.u32 %s23, 4
      %s338 = sadd.s32 %s337, 5
      %p339 = scmp.lt.s32.totalorder %s22, 1
      %s340 = scalar_select %p339, %s22, 1
      %p341 = scmp.lt.s32.totalorder %s338, 9
      %s342 = scalar_select %p341, %s338, 9
      %s343 = smul.addr %s342, 2
      %s344 = smul.addr %s340, 20
      %s345 = sadd.s32 %s343, %s344
      %s346 = smul.addr %s345, 4
      %s347 = scalar_lea.vmem %s2, %s346
      %p348 = pneg %p117
      %p349 = pneg %p114
      %p350 = pneg %p138
      %p351 = pneg %p135
      %p352 = pneg %p166
      %p353 = pneg %p163
      %s354 = smul.u32 4, %s23
      %p355 = scmp.lt.s32.totalorder %s22, 1
      %s356 = scalar_select %p355, %s22, 1
      %p357 = scmp.lt.s32.totalorder %s354, 7
      %s358 = scalar_select %p357, %s354, 7
      %s359 = smul.addr %s356, 8
      %s360 = sadd.s32 %s358, %s359
      %s361 = smul.addr %s360, 4
      %s362 = scalar_lea.vmem %s4, %s361
      %p363 = pneg %p194
      %p364 = pneg %p191
      %p365 = scmp.lt.s32.totalorder %s22, 1
      %s366 = scalar_select %p365, %s22, 1
      %p367 = scmp.lt.s32.totalorder %s23, 1
      %s368 = scalar_select %p367, %s23, 1
      %s369 = smul.addr %s366, 2
      %s370 = sadd.s32 %s368, %s369
      %s371 = smul.addr %s370, 8
      %s372 = scalar_lea.vmem %s5, %s371
      %p373 = pneg %p222
      %p374 = pneg %p219
      %p375 = scmp.lt.s32.totalorder %s22, 1
      %s376 = scalar_select %p375, %s22, 1
      %p377 = scmp.lt.s32.totalorder %s23, 1
      %s378 = scalar_select %p377, %s23, 1
      %s379 = smul.addr %s376, 2
      %s380 = sadd.s32 %s378, %s379
      %s381 = smul.addr %s380, 8
      %s382 = scalar_lea.vmem %s6, %s381
      %s383 = smul.u32 4, %s23
      %s384 = ssub.s32 10, %s383
      %p385 = scmp.lt.s32.totalorder %s384, 4
      %s386 = scalar_select %p385, %s384, 4
      %s387 = smul.u32 4, %s386
      %s388 = smul.u32 %s387, 2
      %p389 = scmp.lt.s32.totalorder %s22, 1
      %s390 = scalar_select %p389, %s22, 1
      %p391 = scmp.lt.s32.totalorder %s383, 9
      %s392 = scalar_select %p391, %s383, 9
      %s393 = smul.addr %s392, 2
      %s394 = smul.addr %s390, 20
      %s395 = sadd.s32 %s393, %s394
      %s396 = smul.addr %s395, 4
      %s397 = scalar_lea.vmem %s0, %s396
      %s398 = smul.u32 4, %s23
      %s399 = ssub.s32 10, %s398
      %p400 = scmp.lt.s32.totalorder %s399, 4
      %s401 = scalar_select %p400, %s399, 4
      %s402 = smul.u32 4, %s401
      %s403 = smul.u32 %s402, 2
      %s404 = smul.u32 %s23, 4
      %s405 = sadd.s32 %s404, 4
      %p406 = scmp.lt.s32.totalorder %s22, 1
      %s407 = scalar_select %p406, %s22, 1
      %p408 = scmp.lt.s32.totalorder %s405, 9
      %s409 = scalar_select %p408, %s405, 9
      %s410 = smul.addr %s409, 2
      %s411 = smul.addr %s407, 20
      %s412 = sadd.s32 %s410, %s411
      %s413 = smul.addr %s412, 4
      %s414 = scalar_lea.vmem %s1, %s413
      %s415 = smul.u32 %s23, 4
      %s416 = sadd.s32 %s415, 4
      %s417 = smul.u32 %s23, 4
      %s418 = sadd.s32 %s417, 5
      %p419 = scmp.lt.s32.totalorder %s22, 1
      %s420 = scalar_select %p419, %s22, 1
      %p421 = scmp.lt.s32.totalorder %s418, 9
      %s422 = scalar_select %p421, %s418, 9
      %s423 = smul.addr %s422, 2
      %s424 = smul.addr %s420, 20
      %s425 = sadd.s32 %s423, %s424
      %s426 = smul.addr %s425, 4
      %s427 = scalar_lea.vmem %s2, %s426
      %s428 = smul.u32 %s23, 4
      %s429 = sadd.s32 %s428, 5
      %s430 = smul.u32 4, %s23
      %p431 = scmp.lt.s32.totalorder %s22, 1
      %s432 = scalar_select %p431, %s22, 1
      %p433 = scmp.lt.s32.totalorder %s430, 7
      %s434 = scalar_select %p433, %s430, 7
      %s435 = smul.addr %s432, 8
      %s436 = sadd.s32 %s434, %s435
      %s437 = smul.addr %s436, 4
      %s438 = scalar_lea.vmem %s4, %s437
      %s439 = smul.u32 4, %s23
      %p440 = scmp.lt.s32.totalorder %s22, 1
      %s441 = scalar_select %p440, %s22, 1
      %p442 = scmp.lt.s32.totalorder %s23, 1
      %s443 = scalar_select %p442, %s23, 1
      %s444 = smul.addr %s441, 2
      %s445 = sadd.s32 %s443, %s444
      %s446 = smul.addr %s445, 8
      %s447 = scalar_lea.vmem %s5, %s446
      %p448 = scmp.lt.s32.totalorder %s22, 1
      %s449 = scalar_select %p448, %s22, 1
      %p450 = scmp.lt.s32.totalorder %s23, 1
      %s451 = scalar_select %p450, %s23, 1
      %s452 = smul.addr %s449, 2
      %s453 = sadd.s32 %s451, %s452
      %s454 = smul.addr %s453, 8
      %s455 = scalar_lea.vmem %s6, %s454
      %v456 = vld [vmem:[%s397] sm:$0xf]
      %v457 = vld [vmem:[%s397 + $0x4] sm:$0x1]
      %v458 = vld [vmem:[%s397 + $0x8] sm:$0xf]
      %v459 = vld [vmem:[%s397 + $0xc] sm:$0x1]
      %v460 = vld [vmem:[%s397 + $0x10] sm:$0xf]
      %v461 = vld [vmem:[%s397 + $0x14] sm:$0x1]
      %v462 = vld [vmem:[%s397 + $0x18] sm:$0xf]
      %v463 = vld [vmem:[%s397 + $0x1c] sm:$0x1]
      %v464 = vld [vmem:[%s414] sm:$0xf]
      %v465 = vld [vmem:[%s414 + $0x4] sm:$0x1]
      %v466 = vld [vmem:[%s427] sm:$0xf]
      %v467 = vld [vmem:[%s427 + $0x4] sm:$0x1]
      %v468 = vld [vmem:[%s3] sm:$0xf]
      %v469 = vld [vmem:[%s3 + $0x4] sm:$0xf]
      %v470 = vld [vmem:[%s3 + $0x8] sm:$0xf]
      %v471 = vld [vmem:[%s3 + $0xc] sm:$0xf]
      %v472 = vld [vmem:[%s3 + $0x10] sm:$0xf]
      %v473 = vld [vmem:[%s3 + $0x14] sm:$0xf]
      %v474 = vld [vmem:[%s3 + $0x18] sm:$0xf]
      %v475 = vld [vmem:[%s3 + $0x1c] sm:$0xf]
      %v476 = vld [vmem:[%s3 + $0x20] sm:$0xf]
      %v477 = vld [vmem:[%s3 + $0x24] sm:$0xf]
      %v478 = vld [vmem:[%s3 + $0x28] sm:$0xf]
      %v479 = vld [vmem:[%s3 + $0x2c] sm:$0xf]
      %v480 = vld [vmem:[%s3 + $0x30] sm:$0xf]
      %v481 = vld [vmem:[%s3 + $0x34] sm:$0xf]
      %v482 = vld [vmem:[%s3 + $0x38] sm:$0xf]
      %v483 = vld [vmem:[%s3 + $0x3c] sm:$0xf]
      %vm484 = vsmask.f32 3328
      %vm485 = vsmask.f32 7440
      %vm486 = vmor %vm484, %vm485
      %v488 = vshrl.u32 %v456, 16
      %v490 = vrot.slane %v488, 4
      %v491 = vshll.u32 %v456, 16
      %v493 = vrot.slane %v491, 5
      %v494 = vor.u32 %v490, %v493
      %v495 = vrot.slane %v494, 4
      %v497 = vshll.u32 %v457, 16
      %v499 = vrot.slane %v497, 5
      %v500 = vsel %vm486, %v495, %v499
      %v502 = vshrl.u32 %v458, 16
      %v504 = vrot.slane %v502, 4
      %v505 = vshll.u32 %v458, 16
      %v507 = vrot.slane %v505, 5
      %v508 = vor.u32 %v504, %v507
      %v509 = vrot.slane %v508, 4
      %v511 = vshll.u32 %v459, 16
      %v513 = vrot.slane %v511, 5
      %v514 = vsel %vm486, %v509, %v513
      %v516 = vshrl.u32 %v460, 16
      %v518 = vrot.slane %v516, 4
      %v519 = vshll.u32 %v460, 16
      %v521 = vrot.slane %v519, 5
      %v522 = vor.u32 %v518, %v521
      %v523 = vrot.slane %v522, 4
      %v525 = vshll.u32 %v461, 16
      %v527 = vrot.slane %v525, 5
      %v528 = vsel %vm486, %v523, %v527
      %v530 = vshrl.u32 %v462, 16
      %v532 = vrot.slane %v530, 4
      %v533 = vshll.u32 %v462, 16
      %v535 = vrot.slane %v533, 5
      %v536 = vor.u32 %v532, %v535
      %v537 = vrot.slane %v536, 4
      %v539 = vshll.u32 %v463, 16
      %v541 = vrot.slane %v539, 5
      %v542 = vsel %vm486, %v537, %v541
      %s543 = scalar_lea.vmem %s3, 64
      %v544 = vld [vmem:[%s543] sm:$0xf]
      %v545 = vld [vmem:[%s543 + $0x4] sm:$0xf]
      %v546 = vld [vmem:[%s543 + $0x8] sm:$0xf]
      %v547 = vld [vmem:[%s543 + $0xc] sm:$0xf]
      %v548 = vld [vmem:[%s543 + $0x10] sm:$0xf]
      %v549 = vld [vmem:[%s543 + $0x14] sm:$0xf]
      %v550 = vld [vmem:[%s543 + $0x18] sm:$0xf]
      %v551 = vld [vmem:[%s543 + $0x1c] sm:$0xf]
      %v552 = vld [vmem:[%s543 + $0x20] sm:$0xf]
      %v553 = vld [vmem:[%s543 + $0x24] sm:$0xf]
      %v554 = vld [vmem:[%s543 + $0x28] sm:$0xf]
      %v555 = vld [vmem:[%s543 + $0x2c] sm:$0xf]
      %v556 = vld [vmem:[%s543 + $0x30] sm:$0xf]
      %v557 = vld [vmem:[%s543 + $0x34] sm:$0xf]
      %v558 = vld [vmem:[%s543 + $0x38] sm:$0xf]
      %v559 = vld [vmem:[%s543 + $0x3c] sm:$0xf]
      %v560 = vunpack.c.l.b16 %v500
      %v561 = vunpack.c.l.b16 %v514
      %v562 = vunpack.c.l.b16 %v528
      %v563 = vunpack.c.l.b16 %v542
      %v564 = vpack.c.b16 %v561, %v560
      %v565 = vpack.c.b16 %v563, %v562
      %v584 = vunpack.c.l.b16 %v544
      %v585 = vunpack.c.l.b16 %v545
      %v586 = vunpack.c.l.b16 %v546
      %v587 = vunpack.c.l.b16 %v547
      %v588 = vunpack.c.l.b16 %v548
      %v589 = vunpack.c.l.b16 %v549
      %v590 = vunpack.c.l.b16 %v550
      %v591 = vunpack.c.l.b16 %v551
      %v592 = vunpack.c.l.b16 %v552
      %v593 = vunpack.c.l.b16 %v553
      %v594 = vunpack.c.l.b16 %v554
      %v595 = vunpack.c.l.b16 %v555
      %v596 = vunpack.c.l.b16 %v556
      %v597 = vunpack.c.l.b16 %v557
      %v598 = vunpack.c.l.b16 %v558
      %v599 = vunpack.c.l.b16 %v559
      %v600 = vpack.c.b16 %v585, %v584
      %v601 = vpack.c.b16 %v587, %v586
      %v602 = vpack.c.b16 %v589, %v588
      %v603 = vpack.c.b16 %v591, %v590
      %v604 = vpack.c.b16 %v593, %v592
      %v605 = vpack.c.b16 %v595, %v594
      %v606 = vpack.c.b16 %v597, %v596
      %v607 = vpack.c.b16 %v599, %v598
      %616 = vmatpush.bf16.msra.mxu0 %v607
      %617 = vmatpush.bf16.msra.mxu0 %v606
      %618 = vmatpush.bf16.msra.mxu0 %v605
      %619 = vmatpush.bf16.msra.mxu0 %v604
      %620 = vmatpush.bf16.msra.mxu0 %v603
      %621 = vmatpush.bf16.msra.mxu0 %v602
      %622 = vmatpush.bf16.msra.mxu0 %v601
      %623 = vmatpush.bf16.msra.mxu0 %v600
      %624 = vmatmul.bf16.gmra.mxu0 %v564
      %v625 = vpop.f32.mrf.mxu0
      %v626 = vadd.f32 0.0, %v625
      %v627 = vpop.f32.mrf.mxu0
      %v628 = vadd.f32 0.0, %v627
      %629 = vmatmul.bf16.gmra.mxu0 %v565
      %v630 = vpop.f32.mrf.mxu0
      %v631 = vadd.f32 0.0, %v630
      %v632 = vpop.f32.mrf.mxu0
      %v633 = vadd.f32 0.0, %v632
      %634 = vdwg.mxu0
      %v639 = vunpack.c.l.b16 %v456
      %v640 = vunpack.c.l.b16 %v458
      %v641 = vunpack.c.l.b16 %v460
      %v642 = vunpack.c.l.b16 %v462
      %v643 = vpack.c.b16 %v640, %v639
      %v644 = vpack.c.b16 %v642, %v641
      %v663 = vunpack.c.l.b16 %v468
      %v664 = vunpack.c.l.b16 %v469
      %v665 = vunpack.c.l.b16 %v470
      %v666 = vunpack.c.l.b16 %v471
      %v667 = vunpack.c.l.b16 %v472
      %v668 = vunpack.c.l.b16 %v473
      %v669 = vunpack.c.l.b16 %v474
      %v670 = vunpack.c.l.b16 %v475
      %v671 = vunpack.c.l.b16 %v476
      %v672 = vunpack.c.l.b16 %v477
      %v673 = vunpack.c.l.b16 %v478
      %v674 = vunpack.c.l.b16 %v479
      %v675 = vunpack.c.l.b16 %v480
      %v676 = vunpack.c.l.b16 %v481
      %v677 = vunpack.c.l.b16 %v482
      %v678 = vunpack.c.l.b16 %v483
      %v679 = vpack.c.b16 %v664, %v663
      %v680 = vpack.c.b16 %v666, %v665
      %v681 = vpack.c.b16 %v668, %v667
      %v682 = vpack.c.b16 %v670, %v669
      %v683 = vpack.c.b16 %v672, %v671
      %v684 = vpack.c.b16 %v674, %v673
      %v685 = vpack.c.b16 %v676, %v675
      %v686 = vpack.c.b16 %v678, %v677
      %695 = vmatpush.bf16.msra.mxu0 %v686
      %696 = vmatpush.bf16.msra.mxu0 %v685
      %697 = vmatpush.bf16.msra.mxu0 %v684
      %698 = vmatpush.bf16.msra.mxu0 %v683
      %699 = vmatpush.bf16.msra.mxu0 %v682
      %700 = vmatpush.bf16.msra.mxu0 %v681
      %701 = vmatpush.bf16.msra.mxu0 %v680
      %702 = vmatpush.bf16.msra.mxu0 %v679
      %703 = vmatmul.bf16.gmra.mxu0 %v643
      %v704 = vpop.f32.mrf.mxu0
      %v705 = vadd.f32 %v626, %v704
      %v706 = vpop.f32.mrf.mxu0
      %v707 = vadd.f32 %v628, %v706
      %708 = vmatmul.bf16.gmra.mxu0 %v644
      %v709 = vpop.f32.mrf.mxu0
      %v710 = vadd.f32 %v631, %v709
      %v711 = vpop.f32.mrf.mxu0
      %v712 = vadd.f32 %v633, %v711
      %713 = vdwg.mxu0
      %vm718 = vcmask 1042432
      %vm719 = vcmask 1046532
      %vm720 = vmor %vm718, %vm719
      %v721 = vrot.slane %v456, 5
      %v722 = vrot.slane %v721, 4
      %v723 = vrot.slane %v457, 5
      %v724 = vsel %vm720, %v722, %v723
      %v725 = vrot.slane %v458, 5
      %v726 = vrot.slane %v725, 4
      %v727 = vrot.slane %v459, 5
      %v728 = vsel %vm720, %v726, %v727
      %v729 = vrot.slane %v460, 5
      %v730 = vrot.slane %v729, 4
      %v731 = vrot.slane %v461, 5
      %v732 = vsel %vm720, %v730, %v731
      %v733 = vrot.slane %v462, 5
      %v734 = vrot.slane %v733, 4
      %v735 = vrot.slane %v463, 5
      %v736 = vsel %vm720, %v734, %v735
      %s737 = scalar_lea.vmem %s3, 128
      %v738 = vld [vmem:[%s737] sm:$0xf]
      %v739 = vld [vmem:[%s737 + $0x4] sm:$0xf]
      %v740 = vld [vmem:[%s737 + $0x8] sm:$0xf]
      %v741 = vld [vmem:[%s737 + $0xc] sm:$0xf]
      %v742 = vld [vmem:[%s737 + $0x10] sm:$0xf]
      %v743 = vld [vmem:[%s737 + $0x14] sm:$0xf]
      %v744 = vld [vmem:[%s737 + $0x18] sm:$0xf]
      %v745 = vld [vmem:[%s737 + $0x1c] sm:$0xf]
      %v746 = vld [vmem:[%s737 + $0x20] sm:$0xf]
      %v747 = vld [vmem:[%s737 + $0x24] sm:$0xf]
      %v748 = vld [vmem:[%s737 + $0x28] sm:$0xf]
      %v749 = vld [vmem:[%s737 + $0x2c] sm:$0xf]
      %v750 = vld [vmem:[%s737 + $0x30] sm:$0xf]
      %v751 = vld [vmem:[%s737 + $0x34] sm:$0xf]
      %v752 = vld [vmem:[%s737 + $0x38] sm:$0xf]
      %v753 = vld [vmem:[%s737 + $0x3c] sm:$0xf]
      %v754 = vunpack.c.l.b16 %v724
      %v755 = vunpack.c.l.b16 %v728
      %v756 = vunpack.c.l.b16 %v732
      %v757 = vunpack.c.l.b16 %v736
      %v758 = vpack.c.b16 %v755, %v754
      %v759 = vpack.c.b16 %v757, %v756
      %v778 = vunpack.c.l.b16 %v738
      %v779 = vunpack.c.l.b16 %v739
      %v780 = vunpack.c.l.b16 %v740
      %v781 = vunpack.c.l.b16 %v741
      %v782 = vunpack.c.l.b16 %v742
      %v783 = vunpack.c.l.b16 %v743
      %v784 = vunpack.c.l.b16 %v744
      %v785 = vunpack.c.l.b16 %v745
      %v786 = vunpack.c.l.b16 %v746
      %v787 = vunpack.c.l.b16 %v747
      %v788 = vunpack.c.l.b16 %v748
      %v789 = vunpack.c.l.b16 %v749
      %v790 = vunpack.c.l.b16 %v750
      %v791 = vunpack.c.l.b16 %v751
      %v792 = vunpack.c.l.b16 %v752
      %v793 = vunpack.c.l.b16 %v753
      %v794 = vpack.c.b16 %v779, %v778
      %v795 = vpack.c.b16 %v781, %v780
      %v796 = vpack.c.b16 %v783, %v782
      %v797 = vpack.c.b16 %v785, %v784
      %v798 = vpack.c.b16 %v787, %v786
      %v799 = vpack.c.b16 %v789, %v788
      %v800 = vpack.c.b16 %v791, %v790
      %v801 = vpack.c.b16 %v793, %v792
      %810 = vmatpush.bf16.msra.mxu0 %v801
      %811 = vmatpush.bf16.msra.mxu0 %v800
      %812 = vmatpush.bf16.msra.mxu0 %v799
      %813 = vmatpush.bf16.msra.mxu0 %v798
      %814 = vmatpush.bf16.msra.mxu0 %v797
      %815 = vmatpush.bf16.msra.mxu0 %v796
      %816 = vmatpush.bf16.msra.mxu0 %v795
      %817 = vmatpush.bf16.msra.mxu0 %v794
      %818 = vmatmul.bf16.gmra.mxu0 %v758
      %v819 = vpop.f32.mrf.mxu0
      %v820 = vadd.f32 0.0, %v819
      %v821 = vpop.f32.mrf.mxu0
      %v822 = vadd.f32 0.0, %v821
      %823 = vmatmul.bf16.gmra.mxu0 %v759
      %v824 = vpop.f32.mrf.mxu0
      %v825 = vadd.f32 0.0, %v824
      %v826 = vpop.f32.mrf.mxu0
      %v827 = vadd.f32 0.0, %v826
      %828 = vdwg.mxu0
      %v829 = vadd.f32 %v705, %v820
      %v830 = vadd.f32 %v707, %v822
      %v831 = vadd.f32 %v710, %v825
      %v832 = vadd.f32 %v712, %v827
      %s833 = scalar_lea.vmem %s3, 192
      %v834 = vld [vmem:[%s833] sm:$0xf]
      %v835 = vld [vmem:[%s833 + $0x4] sm:$0xf]
      %v836 = vld [vmem:[%s833 + $0x8] sm:$0xf]
      %v837 = vld [vmem:[%s833 + $0xc] sm:$0xf]
      %v838 = vld [vmem:[%s833 + $0x10] sm:$0xf]
      %v839 = vld [vmem:[%s833 + $0x14] sm:$0xf]
      %v840 = vld [vmem:[%s833 + $0x18] sm:$0xf]
      %v841 = vld [vmem:[%s833 + $0x1c] sm:$0xf]
      %v842 = vld [vmem:[%s833 + $0x20] sm:$0xf]
      %v843 = vld [vmem:[%s833 + $0x24] sm:$0xf]
      %v844 = vld [vmem:[%s833 + $0x28] sm:$0xf]
      %v845 = vld [vmem:[%s833 + $0x2c] sm:$0xf]
      %v846 = vld [vmem:[%s833 + $0x30] sm:$0xf]
      %v847 = vld [vmem:[%s833 + $0x34] sm:$0xf]
      %v848 = vld [vmem:[%s833 + $0x38] sm:$0xf]
      %v849 = vld [vmem:[%s833 + $0x3c] sm:$0xf]
      %v851 = vunpack.c.l.b16 %v464
      %v852 = vpack.c.b16 %v641, %v640
      %v853 = vpack.c.b16 %v851, %v642
      %v872 = vunpack.c.l.b16 %v834
      %v873 = vunpack.c.l.b16 %v835
      %v874 = vunpack.c.l.b16 %v836
      %v875 = vunpack.c.l.b16 %v837
      %v876 = vunpack.c.l.b16 %v838
      %v877 = vunpack.c.l.b16 %v839
      %v878 = vunpack.c.l.b16 %v840
      %v879 = vunpack.c.l.b16 %v841
      %v880 = vunpack.c.l.b16 %v842
      %v881 = vunpack.c.l.b16 %v843
      %v882 = vunpack.c.l.b16 %v844
      %v883 = vunpack.c.l.b16 %v845
      %v884 = vunpack.c.l.b16 %v846
      %v885 = vunpack.c.l.b16 %v847
      %v886 = vunpack.c.l.b16 %v848
      %v887 = vunpack.c.l.b16 %v849
      %v888 = vpack.c.b16 %v873, %v872
      %v889 = vpack.c.b16 %v875, %v874
      %v890 = vpack.c.b16 %v877, %v876
      %v891 = vpack.c.b16 %v879, %v878
      %v892 = vpack.c.b16 %v881, %v880
      %v893 = vpack.c.b16 %v883, %v882
      %v894 = vpack.c.b16 %v885, %v884
      %v895 = vpack.c.b16 %v887, %v886
      %904 = vmatpush.bf16.msra.mxu0 %v895
      %905 = vmatpush.bf16.msra.mxu0 %v894
      %906 = vmatpush.bf16.msra.mxu0 %v893
      %907 = vmatpush.bf16.msra.mxu0 %v892
      %908 = vmatpush.bf16.msra.mxu0 %v891
      %909 = vmatpush.bf16.msra.mxu0 %v890
      %910 = vmatpush.bf16.msra.mxu0 %v889
      %911 = vmatpush.bf16.msra.mxu0 %v888
      %912 = vmatmul.bf16.gmra.mxu0 %v852
      %v913 = vpop.f32.mrf.mxu0
      %v914 = vadd.f32 0.0, %v913
      %v915 = vpop.f32.mrf.mxu0
      %v916 = vadd.f32 0.0, %v915
      %917 = vmatmul.bf16.gmra.mxu0 %v853
      %v918 = vpop.f32.mrf.mxu0
      %v919 = vadd.f32 0.0, %v918
      %v920 = vpop.f32.mrf.mxu0
      %v921 = vadd.f32 0.0, %v920
      %922 = vdwg.mxu0
      %v923 = vadd.f32 %v829, %v914
      %v924 = vadd.f32 %v830, %v916
      %v925 = vadd.f32 %v831, %v919
      %v926 = vadd.f32 %v832, %v921
      %v928 = vshrl.u32 %v464, 16
      %v930 = vrot.slane %v928, 4
      %v931 = vshll.u32 %v464, 16
      %v933 = vrot.slane %v931, 5
      %v934 = vor.u32 %v930, %v933
      %v935 = vrot.slane %v934, 4
      %v937 = vshll.u32 %v465, 16
      %v939 = vrot.slane %v937, 5
      %v940 = vsel %vm486, %v935, %v939
      %s941 = scalar_lea.vmem %s3, 256
      %v942 = vld [vmem:[%s941] sm:$0xf]
      %v943 = vld [vmem:[%s941 + $0x4] sm:$0xf]
      %v944 = vld [vmem:[%s941 + $0x8] sm:$0xf]
      %v945 = vld [vmem:[%s941 + $0xc] sm:$0xf]
      %v946 = vld [vmem:[%s941 + $0x10] sm:$0xf]
      %v947 = vld [vmem:[%s941 + $0x14] sm:$0xf]
      %v948 = vld [vmem:[%s941 + $0x18] sm:$0xf]
      %v949 = vld [vmem:[%s941 + $0x1c] sm:$0xf]
      %v950 = vld [vmem:[%s941 + $0x20] sm:$0xf]
      %v951 = vld [vmem:[%s941 + $0x24] sm:$0xf]
      %v952 = vld [vmem:[%s941 + $0x28] sm:$0xf]
      %v953 = vld [vmem:[%s941 + $0x2c] sm:$0xf]
      %v954 = vld [vmem:[%s941 + $0x30] sm:$0xf]
      %v955 = vld [vmem:[%s941 + $0x34] sm:$0xf]
      %v956 = vld [vmem:[%s941 + $0x38] sm:$0xf]
      %v957 = vld [vmem:[%s941 + $0x3c] sm:$0xf]
      %v958 = vunpack.c.l.b16 %v940
      %v959 = vpack.c.b16 %v562, %v561
      %v960 = vpack.c.b16 %v958, %v563
      %v979 = vunpack.c.l.b16 %v942
      %v980 = vunpack.c.l.b16 %v943
      %v981 = vunpack.c.l.b16 %v944
      %v982 = vunpack.c.l.b16 %v945
      %v983 = vunpack.c.l.b16 %v946
      %v984 = vunpack.c.l.b16 %v947
      %v985 = vunpack.c.l.b16 %v948
      %v986 = vunpack.c.l.b16 %v949
      %v987 = vunpack.c.l.b16 %v950
      %v988 = vunpack.c.l.b16 %v951
      %v989 = vunpack.c.l.b16 %v952
      %v990 = vunpack.c.l.b16 %v953
      %v991 = vunpack.c.l.b16 %v954
      %v992 = vunpack.c.l.b16 %v955
      %v993 = vunpack.c.l.b16 %v956
      %v994 = vunpack.c.l.b16 %v957
      %v995 = vpack.c.b16 %v980, %v979
      %v996 = vpack.c.b16 %v982, %v981
      %v997 = vpack.c.b16 %v984, %v983
      %v998 = vpack.c.b16 %v986, %v985
      %v999 = vpack.c.b16 %v988, %v987
      %v1000 = vpack.c.b16 %v990, %v989
      %v1001 = vpack.c.b16 %v992, %v991
      %v1002 = vpack.c.b16 %v994, %v993
      %1011 = vmatpush.bf16.msra.mxu0 %v1002
      %1012 = vmatpush.bf16.msra.mxu0 %v1001
      %1013 = vmatpush.bf16.msra.mxu0 %v1000
      %1014 = vmatpush.bf16.msra.mxu0 %v999
      %1015 = vmatpush.bf16.msra.mxu0 %v998
      %1016 = vmatpush.bf16.msra.mxu0 %v997
      %1017 = vmatpush.bf16.msra.mxu0 %v996
      %1018 = vmatpush.bf16.msra.mxu0 %v995
      %1019 = vmatmul.bf16.gmra.mxu0 %v959
      %v1020 = vpop.f32.mrf.mxu0
      %v1021 = vadd.f32 0.0, %v1020
      %v1022 = vpop.f32.mrf.mxu0
      %v1023 = vadd.f32 0.0, %v1022
      %1024 = vmatmul.bf16.gmra.mxu0 %v960
      %v1025 = vpop.f32.mrf.mxu0
      %v1026 = vadd.f32 0.0, %v1025
      %v1027 = vpop.f32.mrf.mxu0
      %v1028 = vadd.f32 0.0, %v1027
      %1029 = vdwg.mxu0
      %v1030 = vadd.f32 %v923, %v1021
      %v1031 = vadd.f32 %v924, %v1023
      %v1032 = vadd.f32 %v925, %v1026
      %v1033 = vadd.f32 %v926, %v1028
      %v1035 = vrot.slane %v464, 5
      %v1036 = vrot.slane %v1035, 4
      %v1037 = vrot.slane %v465, 5
      %v1038 = vsel %vm720, %v1036, %v1037
      %s1039 = scalar_lea.vmem %s3, 320
      %v1040 = vld [vmem:[%s1039] sm:$0xf]
      %v1041 = vld [vmem:[%s1039 + $0x4] sm:$0xf]
      %v1042 = vld [vmem:[%s1039 + $0x8] sm:$0xf]
      %v1043 = vld [vmem:[%s1039 + $0xc] sm:$0xf]
      %v1044 = vld [vmem:[%s1039 + $0x10] sm:$0xf]
      %v1045 = vld [vmem:[%s1039 + $0x14] sm:$0xf]
      %v1046 = vld [vmem:[%s1039 + $0x18] sm:$0xf]
      %v1047 = vld [vmem:[%s1039 + $0x1c] sm:$0xf]
      %v1048 = vld [vmem:[%s1039 + $0x20] sm:$0xf]
      %v1049 = vld [vmem:[%s1039 + $0x24] sm:$0xf]
      %v1050 = vld [vmem:[%s1039 + $0x28] sm:$0xf]
      %v1051 = vld [vmem:[%s1039 + $0x2c] sm:$0xf]
      %v1052 = vld [vmem:[%s1039 + $0x30] sm:$0xf]
      %v1053 = vld [vmem:[%s1039 + $0x34] sm:$0xf]
      %v1054 = vld [vmem:[%s1039 + $0x38] sm:$0xf]
      %v1055 = vld [vmem:[%s1039 + $0x3c] sm:$0xf]
      %v1056 = vunpack.c.l.b16 %v1038
      %v1057 = vpack.c.b16 %v756, %v755
      %v1058 = vpack.c.b16 %v1056, %v757
      %v1077 = vunpack.c.l.b16 %v1040
      %v1078 = vunpack.c.l.b16 %v1041
      %v1079 = vunpack.c.l.b16 %v1042
      %v1080 = vunpack.c.l.b16 %v1043
      %v1081 = vunpack.c.l.b16 %v1044
      %v1082 = vunpack.c.l.b16 %v1045
      %v1083 = vunpack.c.l.b16 %v1046
      %v1084 = vunpack.c.l.b16 %v1047
      %v1085 = vunpack.c.l.b16 %v1048
      %v1086 = vunpack.c.l.b16 %v1049
      %v1087 = vunpack.c.l.b16 %v1050
      %v1088 = vunpack.c.l.b16 %v1051
      %v1089 = vunpack.c.l.b16 %v1052
      %v1090 = vunpack.c.l.b16 %v1053
      %v1091 = vunpack.c.l.b16 %v1054
      %v1092 = vunpack.c.l.b16 %v1055
      %v1093 = vpack.c.b16 %v1078, %v1077
      %v1094 = vpack.c.b16 %v1080, %v1079
      %v1095 = vpack.c.b16 %v1082, %v1081
      %v1096 = vpack.c.b16 %v1084, %v1083
      %v1097 = vpack.c.b16 %v1086, %v1085
      %v1098 = vpack.c.b16 %v1088, %v1087
      %v1099 = vpack.c.b16 %v1090, %v1089
      %v1100 = vpack.c.b16 %v1092, %v1091
      %1109 = vmatpush.bf16.msra.mxu0 %v1100
      %1110 = vmatpush.bf16.msra.mxu0 %v1099
      %1111 = vmatpush.bf16.msra.mxu0 %v1098
      %1112 = vmatpush.bf16.msra.mxu0 %v1097
      %1113 = vmatpush.bf16.msra.mxu0 %v1096
      %1114 = vmatpush.bf16.msra.mxu0 %v1095
      %1115 = vmatpush.bf16.msra.mxu0 %v1094
      %1116 = vmatpush.bf16.msra.mxu0 %v1093
      %1117 = vmatmul.bf16.gmra.mxu0 %v1057
      %v1118 = vpop.f32.mrf.mxu0
      %v1119 = vadd.f32 0.0, %v1118
      %v1120 = vpop.f32.mrf.mxu0
      %v1121 = vadd.f32 0.0, %v1120
      %1122 = vmatmul.bf16.gmra.mxu0 %v1058
      %v1123 = vpop.f32.mrf.mxu0
      %v1124 = vadd.f32 0.0, %v1123
      %v1125 = vpop.f32.mrf.mxu0
      %v1126 = vadd.f32 0.0, %v1125
      %1127 = vdwg.mxu0
      %v1128 = vadd.f32 %v1030, %v1119
      %v1129 = vadd.f32 %v1031, %v1121
      %v1130 = vadd.f32 %v1032, %v1124
      %v1131 = vadd.f32 %v1033, %v1126
      %s1132 = scalar_lea.vmem %s3, 384
      %v1133 = vld [vmem:[%s1132] sm:$0xf]
      %v1134 = vld [vmem:[%s1132 + $0x4] sm:$0xf]
      %v1135 = vld [vmem:[%s1132 + $0x8] sm:$0xf]
      %v1136 = vld [vmem:[%s1132 + $0xc] sm:$0xf]
      %v1137 = vld [vmem:[%s1132 + $0x10] sm:$0xf]
      %v1138 = vld [vmem:[%s1132 + $0x14] sm:$0xf]
      %v1139 = vld [vmem:[%s1132 + $0x18] sm:$0xf]
      %v1140 = vld [vmem:[%s1132 + $0x1c] sm:$0xf]
      %v1141 = vld [vmem:[%s1132 + $0x20] sm:$0xf]
      %v1142 = vld [vmem:[%s1132 + $0x24] sm:$0xf]
      %v1143 = vld [vmem:[%s1132 + $0x28] sm:$0xf]
      %v1144 = vld [vmem:[%s1132 + $0x2c] sm:$0xf]
      %v1145 = vld [vmem:[%s1132 + $0x30] sm:$0xf]
      %v1146 = vld [vmem:[%s1132 + $0x34] sm:$0xf]
      %v1147 = vld [vmem:[%s1132 + $0x38] sm:$0xf]
      %v1148 = vld [vmem:[%s1132 + $0x3c] sm:$0xf]
      %v1150 = vunpack.c.l.b16 %v466
      %v1151 = vpack.c.b16 %v1150, %v851
      %v1169 = vunpack.c.l.b16 %v1133
      %v1170 = vunpack.c.l.b16 %v1134
      %v1171 = vunpack.c.l.b16 %v1135
      %v1172 = vunpack.c.l.b16 %v1136
      %v1173 = vunpack.c.l.b16 %v1137
      %v1174 = vunpack.c.l.b16 %v1138
      %v1175 = vunpack.c.l.b16 %v1139
      %v1176 = vunpack.c.l.b16 %v1140
      %v1177 = vunpack.c.l.b16 %v1141
      %v1178 = vunpack.c.l.b16 %v1142
      %v1179 = vunpack.c.l.b16 %v1143
      %v1180 = vunpack.c.l.b16 %v1144
      %v1181 = vunpack.c.l.b16 %v1145
      %v1182 = vunpack.c.l.b16 %v1146
      %v1183 = vunpack.c.l.b16 %v1147
      %v1184 = vunpack.c.l.b16 %v1148
      %v1185 = vpack.c.b16 %v1170, %v1169
      %v1186 = vpack.c.b16 %v1172, %v1171
      %v1187 = vpack.c.b16 %v1174, %v1173
      %v1188 = vpack.c.b16 %v1176, %v1175
      %v1189 = vpack.c.b16 %v1178, %v1177
      %v1190 = vpack.c.b16 %v1180, %v1179
      %v1191 = vpack.c.b16 %v1182, %v1181
      %v1192 = vpack.c.b16 %v1184, %v1183
      %1201 = vmatpush.bf16.msra.mxu0 %v1192
      %1202 = vmatpush.bf16.msra.mxu0 %v1191
      %1203 = vmatpush.bf16.msra.mxu0 %v1190
      %1204 = vmatpush.bf16.msra.mxu0 %v1189
      %1205 = vmatpush.bf16.msra.mxu0 %v1188
      %1206 = vmatpush.bf16.msra.mxu0 %v1187
      %1207 = vmatpush.bf16.msra.mxu0 %v1186
      %1208 = vmatpush.bf16.msra.mxu0 %v1185
      %1209 = vmatmul.bf16.gmra.mxu0 %v644
      %v1210 = vpop.f32.mrf.mxu0
      %v1211 = vadd.f32 0.0, %v1210
      %v1212 = vpop.f32.mrf.mxu0
      %v1213 = vadd.f32 0.0, %v1212
      %1214 = vmatmul.bf16.gmra.mxu0 %v1151
      %v1215 = vpop.f32.mrf.mxu0
      %v1216 = vadd.f32 0.0, %v1215
      %v1217 = vpop.f32.mrf.mxu0
      %v1218 = vadd.f32 0.0, %v1217
      %1219 = vdwg.mxu0
      %v1220 = vadd.f32 %v1128, %v1211
      %v1221 = vadd.f32 %v1129, %v1213
      %v1222 = vadd.f32 %v1130, %v1216
      %v1223 = vadd.f32 %v1131, %v1218
      %v1225 = vshrl.u32 %v466, 16
      %v1227 = vrot.slane %v1225, 4
      %v1228 = vshll.u32 %v466, 16
      %v1230 = vrot.slane %v1228, 5
      %v1231 = vor.u32 %v1227, %v1230
      %v1232 = vrot.slane %v1231, 4
      %v1234 = vshll.u32 %v467, 16
      %v1236 = vrot.slane %v1234, 5
      %v1237 = vsel %vm486, %v1232, %v1236
      %s1238 = scalar_lea.vmem %s3, 448
      %v1239 = vld [vmem:[%s1238] sm:$0xf]
      %v1240 = vld [vmem:[%s1238 + $0x4] sm:$0xf]
      %v1241 = vld [vmem:[%s1238 + $0x8] sm:$0xf]
      %v1242 = vld [vmem:[%s1238 + $0xc] sm:$0xf]
      %v1243 = vld [vmem:[%s1238 + $0x10] sm:$0xf]
      %v1244 = vld [vmem:[%s1238 + $0x14] sm:$0xf]
      %v1245 = vld [vmem:[%s1238 + $0x18] sm:$0xf]
      %v1246 = vld [vmem:[%s1238 + $0x1c] sm:$0xf]
      %v1247 = vld [vmem:[%s1238 + $0x20] sm:$0xf]
      %v1248 = vld [vmem:[%s1238 + $0x24] sm:$0xf]
      %v1249 = vld [vmem:[%s1238 + $0x28] sm:$0xf]
      %v1250 = vld [vmem:[%s1238 + $0x2c] sm:$0xf]
      %v1251 = vld [vmem:[%s1238 + $0x30] sm:$0xf]
      %v1252 = vld [vmem:[%s1238 + $0x34] sm:$0xf]
      %v1253 = vld [vmem:[%s1238 + $0x38] sm:$0xf]
      %v1254 = vld [vmem:[%s1238 + $0x3c] sm:$0xf]
      %v1255 = vunpack.c.l.b16 %v1237
      %v1256 = vpack.c.b16 %v1255, %v958
      %v1274 = vunpack.c.l.b16 %v1239
      %v1275 = vunpack.c.l.b16 %v1240
      %v1276 = vunpack.c.l.b16 %v1241
      %v1277 = vunpack.c.l.b16 %v1242
      %v1278 = vunpack.c.l.b16 %v1243
      %v1279 = vunpack.c.l.b16 %v1244
      %v1280 = vunpack.c.l.b16 %v1245
      %v1281 = vunpack.c.l.b16 %v1246
      %v1282 = vunpack.c.l.b16 %v1247
      %v1283 = vunpack.c.l.b16 %v1248
      %v1284 = vunpack.c.l.b16 %v1249
      %v1285 = vunpack.c.l.b16 %v1250
      %v1286 = vunpack.c.l.b16 %v1251
      %v1287 = vunpack.c.l.b16 %v1252
      %v1288 = vunpack.c.l.b16 %v1253
      %v1289 = vunpack.c.l.b16 %v1254
      %v1290 = vpack.c.b16 %v1275, %v1274
      %v1291 = vpack.c.b16 %v1277, %v1276
      %v1292 = vpack.c.b16 %v1279, %v1278
      %v1293 = vpack.c.b16 %v1281, %v1280
      %v1294 = vpack.c.b16 %v1283, %v1282
      %v1295 = vpack.c.b16 %v1285, %v1284
      %v1296 = vpack.c.b16 %v1287, %v1286
      %v1297 = vpack.c.b16 %v1289, %v1288
      %1306 = vmatpush.bf16.msra.mxu0 %v1297
      %1307 = vmatpush.bf16.msra.mxu0 %v1296
      %1308 = vmatpush.bf16.msra.mxu0 %v1295
      %1309 = vmatpush.bf16.msra.mxu0 %v1294
      %1310 = vmatpush.bf16.msra.mxu0 %v1293
      %1311 = vmatpush.bf16.msra.mxu0 %v1292
      %1312 = vmatpush.bf16.msra.mxu0 %v1291
      %1313 = vmatpush.bf16.msra.mxu0 %v1290
      %1314 = vmatmul.bf16.gmra.mxu0 %v565
      %v1315 = vpop.f32.mrf.mxu0
      %v1316 = vadd.f32 0.0, %v1315
      %v1317 = vpop.f32.mrf.mxu0
      %v1318 = vadd.f32 0.0, %v1317
      %1319 = vmatmul.bf16.gmra.mxu0 %v1256
      %v1320 = vpop.f32.mrf.mxu0
      %v1321 = vadd.f32 0.0, %v1320
      %v1322 = vpop.f32.mrf.mxu0
      %v1323 = vadd.f32 0.0, %v1322
      %1324 = vdwg.mxu0
      %v1325 = vadd.f32 %v1220, %v1316
      %v1326 = vadd.f32 %v1221, %v1318
      %v1327 = vadd.f32 %v1222, %v1321
      %v1328 = vadd.f32 %v1223, %v1323
      %v1330 = vrot.slane %v466, 5
      %v1331 = vrot.slane %v1330, 4
      %v1332 = vrot.slane %v467, 5
      %v1333 = vsel %vm720, %v1331, %v1332
      %s1334 = scalar_lea.vmem %s3, 512
      %v1335 = vld [vmem:[%s1334] sm:$0xf]
      %v1336 = vld [vmem:[%s1334 + $0x4] sm:$0xf]
      %v1337 = vld [vmem:[%s1334 + $0x8] sm:$0xf]
      %v1338 = vld [vmem:[%s1334 + $0xc] sm:$0xf]
      %v1339 = vld [vmem:[%s1334 + $0x10] sm:$0xf]
      %v1340 = vld [vmem:[%s1334 + $0x14] sm:$0xf]
      %v1341 = vld [vmem:[%s1334 + $0x18] sm:$0xf]
      %v1342 = vld [vmem:[%s1334 + $0x1c] sm:$0xf]
      %v1343 = vld [vmem:[%s1334 + $0x20] sm:$0xf]
      %v1344 = vld [vmem:[%s1334 + $0x24] sm:$0xf]
      %v1345 = vld [vmem:[%s1334 + $0x28] sm:$0xf]
      %v1346 = vld [vmem:[%s1334 + $0x2c] sm:$0xf]
      %v1347 = vld [vmem:[%s1334 + $0x30] sm:$0xf]
      %v1348 = vld [vmem:[%s1334 + $0x34] sm:$0xf]
      %v1349 = vld [vmem:[%s1334 + $0x38] sm:$0xf]
      %v1350 = vld [vmem:[%s1334 + $0x3c] sm:$0xf]
      %v1351 = vunpack.c.l.b16 %v1333
      %v1352 = vpack.c.b16 %v1351, %v1056
      %v1370 = vunpack.c.l.b16 %v1335
      %v1371 = vunpack.c.l.b16 %v1336
      %v1372 = vunpack.c.l.b16 %v1337
      %v1373 = vunpack.c.l.b16 %v1338
      %v1374 = vunpack.c.l.b16 %v1339
      %v1375 = vunpack.c.l.b16 %v1340
      %v1376 = vunpack.c.l.b16 %v1341
      %v1377 = vunpack.c.l.b16 %v1342
      %v1378 = vunpack.c.l.b16 %v1343
      %v1379 = vunpack.c.l.b16 %v1344
      %v1380 = vunpack.c.l.b16 %v1345
      %v1381 = vunpack.c.l.b16 %v1346
      %v1382 = vunpack.c.l.b16 %v1347
      %v1383 = vunpack.c.l.b16 %v1348
      %v1384 = vunpack.c.l.b16 %v1349
      %v1385 = vunpack.c.l.b16 %v1350
      %v1386 = vpack.c.b16 %v1371, %v1370
      %v1387 = vpack.c.b16 %v1373, %v1372
      %v1388 = vpack.c.b16 %v1375, %v1374
      %v1389 = vpack.c.b16 %v1377, %v1376
      %v1390 = vpack.c.b16 %v1379, %v1378
      %v1391 = vpack.c.b16 %v1381, %v1380
      %v1392 = vpack.c.b16 %v1383, %v1382
      %v1393 = vpack.c.b16 %v1385, %v1384
      %1402 = vmatpush.bf16.msra.mxu0 %v1393
      %1403 = vmatpush.bf16.msra.mxu0 %v1392
      %1404 = vmatpush.bf16.msra.mxu0 %v1391
      %1405 = vmatpush.bf16.msra.mxu0 %v1390
      %1406 = vmatpush.bf16.msra.mxu0 %v1389
      %1407 = vmatpush.bf16.msra.mxu0 %v1388
      %1408 = vmatpush.bf16.msra.mxu0 %v1387
      %1409 = vmatpush.bf16.msra.mxu0 %v1386
      %1410 = vmatmul.bf16.gmra.mxu0 %v759
      %v1411 = vpop.f32.mrf.mxu0
      %v1412 = vadd.f32 0.0, %v1411
      %v1413 = vpop.f32.mrf.mxu0
      %v1414 = vadd.f32 0.0, %v1413
      %1415 = vmatmul.bf16.gmra.mxu0 %v1352
      %v1416 = vpop.f32.mrf.mxu0
      %v1417 = vadd.f32 0.0, %v1416
      %v1418 = vpop.f32.mrf.mxu0
      %v1419 = vadd.f32 0.0, %v1418
      %1420 = vdwg.mxu0
      %v1421 = vadd.f32 %v1325, %v1412
      %v1422 = vadd.f32 %v1326, %v1414
      %v1423 = vadd.f32 %v1327, %v1417
      %v1424 = vadd.f32 %v1328, %v1419
      %v1425 = vadd.f32 %v1421, %v1422
      %v1426 = vadd.f32 %v1425, %v1423
      %v1427 = vadd.f32 %v1426, %v1424
      %v1428 = vrot.slane %v1427, 4
      %v1429 = vadd.f32 %v1427, %v1428
      %v1430 = vrot.slane %v1429, 2
      %v1431 = vadd.f32 %v1429, %v1430
      %v1432 = vrot.slane %v1431, 1
      %v1433 = vadd.f32 %v1431, %v1432
      %v1434 = vmul.f32 %v1421, %v1421
      %v1435 = vmul.f32 %v1422, %v1422
      %v1436 = vmul.f32 %v1423, %v1423
      %v1437 = vmul.f32 %v1424, %v1424
      %v1438 = vadd.f32 %v1434, %v1435
      %v1439 = vadd.f32 %v1438, %v1436
      %v1440 = vadd.f32 %v1439, %v1437
      %v1441 = vrot.slane %v1440, 4
      %v1442 = vadd.f32 %v1440, %v1441
      %v1443 = vrot.slane %v1442, 2
      %v1444 = vadd.f32 %v1442, %v1443
      %v1445 = vrot.slane %v1444, 1
      %v1446 = vadd.f32 %v1444, %v1445
      %1447 = vst [vmem:[%s447] sm:$0xff] %v1433
      %1448 = vst [vmem:[%s455] sm:$0xff] %v1446
      %v1449 = vpack.c.bf16 %v1421, %v1421
      %v1450 = vpack.c.bf16 %v1422, %v1422
      %v1451 = vpack.c.bf16 %v1423, %v1423
      %v1452 = vpack.c.bf16 %v1424, %v1424
      %1453 = vst [vmem:[%s438] sm:$0xf] %v1449
      %1454 = vst [vmem:[%s438 + $0x4] sm:$0xf] %v1450
      %1455 = vst [vmem:[%s438 + $0x8] sm:$0xf] %v1451
      %1456 = vst [vmem:[%s438 + $0xc] sm:$0xf] %v1452
      %s1457 = smul.u32 4, %s23
      %p1458 = scmp.lt.s32.totalorder %s22, 1
      %s1459 = scalar_select %p1458, %s22, 1
      %p1460 = scmp.lt.s32.totalorder %s1457, 7
      %s1461 = scalar_select %p1460, %s1457, 7
      %s1462 = smul.addr %s1459, 8
      %s1463 = sadd.s32 %s1461, %s1462
      %s1464 = smul.addr %s1463, 4
      %s1465 = scalar_lea.vmem %s4, %s1464
      %p1466 = scmp.lt.s32.totalorder %s22, 1
      %s1467 = scalar_select %p1466, %s22, 1
      %p1468 = scmp.lt.s32.totalorder %s23, 1
      %s1469 = scalar_select %p1468, %s23, 1
      %s1470 = smul.addr %s1467, 2
      %s1471 = sadd.s32 %s1469, %s1470
      %s1472 = smul.addr %s1471, 8
      %s1473 = scalar_lea.vmem %s5, %s1472
      %p1474 = scmp.lt.s32.totalorder %s22, 1
      %s1475 = scalar_select %p1474, %s22, 1
      %p1476 = scmp.lt.s32.totalorder %s23, 1
      %s1477 = scalar_select %p1476, %s23, 1
      %s1478 = smul.addr %s1475, 2
      %s1479 = sadd.s32 %s1477, %s1478
      %s1480 = smul.addr %s1479, 8
      %s1481 = scalar_lea.vmem %s6, %s1480
      // Predicated region
      $region37: #{resblock_forward.6} parent=35 // pred_check
        %p1482 = pneg %p163
      $region38: #{resblock_forward.6} parent=35 // pred_check_branch
        %1484 = sbr.rel (%p1482) target = $region40
      $region39: #{resblock_forward.6} parent=35 // pred_region
        %s1485 = smul.u32 4, %s23
      $region40: #{resblock_forward.6} parent=35 // pred_fallthru
        _
      // Predicated region
      $region41: #{resblock_forward.6} parent=35 // pred_check
        %p1486 = pneg %p191
      $region42: #{resblock_forward.6} parent=35 // pred_check_branch
        %1488 = sbr.rel (%p1486) target = $region44
      $region43: #{resblock_forward.6} parent=35 // pred_region
        _
      $region44: #{resblock_forward.6} parent=35 // pred_fallthru
        _
      // Predicated region
      $region45: #{resblock_forward.6} parent=35 // pred_check
        %p1489 = pneg %p219
      $region46: #{resblock_forward.6} parent=35 // pred_check_branch
        %1491 = sbr.rel (%p1489) target = $region48
      $region47: #{resblock_forward.6} parent=35 // pred_region
        _
      $region48: #{resblock_forward.6} parent=35 // pred_fallthru
        _
    $region36: #{resblock_forward.6} parent=5 // pred_fallthru
      _
    %p1492 = scmp.le.s32.totalorder 2, %s13
    // Predicated region
    $region49: #{resblock_forward.6} parent=5 // pred_check
      %p1493 = pneg %p1492
    $region50: #{resblock_forward.6} parent=5 // pred_check_branch
      %1495 = sbr.rel (%p1493) target = $region52
    $region51: #{resblock_forward.6} parent=5 // pred_region
      %s1496 = ssub.s32 %s13, 2
      // Predicated region
      $region53: #{resblock_forward.6} parent=51 // pred_check
        %p1497 = pneg %p169
      $region54: #{resblock_forward.6} parent=51 // pred_check_branch
        %1499 = sbr.rel (%p1497) target = $region56
      $region55: #{resblock_forward.6} parent=51 // pred_region
        %s1500 = smul.u32 4, %s25
        %p1501 = scmp.lt.s32.totalorder %s24, 1
        %s1502 = scalar_select %p1501, %s24, 1
        %p1503 = scmp.lt.s32.totalorder %s1500, 7
        %s1504 = scalar_select %p1503, %s1500, 7
        %s1505 = smul.addr %s1502, 8
        %s1506 = sadd.s32 %s1504, %s1505
        %s1507 = smul.addr %s1506, 4
        %s1508 = scalar_lea.vmem %s4, %s1507
      $region56: #{resblock_forward.6} parent=51 // pred_fallthru
        _
      // Predicated region
      $region57: #{resblock_forward.6} parent=51 // pred_check
        %p1509 = pneg %p197
      $region58: #{resblock_forward.6} parent=51 // pred_check_branch
        %1511 = sbr.rel (%p1509) target = $region60
      $region59: #{resblock_forward.6} parent=51 // pred_region
        %p1512 = scmp.lt.s32.totalorder %s24, 1
        %s1513 = scalar_select %p1512, %s24, 1
        %p1514 = scmp.lt.s32.totalorder %s25, 1
        %s1515 = scalar_select %p1514, %s25, 1
        %s1516 = smul.addr %s1513, 2
        %s1517 = sadd.s32 %s1515, %s1516
        %s1518 = smul.addr %s1517, 8
        %s1519 = scalar_lea.vmem %s5, %s1518
      $region60: #{resblock_forward.6} parent=51 // pred_fallthru
        _
      // Predicated region
      $region61: #{resblock_forward.6} parent=51 // pred_check
        %p1520 = pneg %p225
      $region62: #{resblock_forward.6} parent=51 // pred_check_branch
        %1522 = sbr.rel (%p1520) target = $region64
      $region63: #{resblock_forward.6} parent=51 // pred_region
        %p1523 = scmp.lt.s32.totalorder %s24, 1
        %s1524 = scalar_select %p1523, %s24, 1
        %p1525 = scmp.lt.s32.totalorder %s25, 1
        %s1526 = scalar_select %p1525, %s25, 1
        %s1527 = smul.addr %s1524, 2
        %s1528 = sadd.s32 %s1526, %s1527
        %s1529 = smul.addr %s1528, 8
        %s1530 = scalar_lea.vmem %s6, %s1529
      $region64: #{resblock_forward.6} parent=51 // pred_fallthru
        _
    $region52: #{resblock_forward.6} parent=5 // pred_fallthru
      _
  $region6: #{resblock_forward.6} parent=0 // loop_footer
    %s17 = sadd.s32 1, %s13
  $region7: #{resblock_forward.6} parent=0 // loop_footer_branch
    %12 = sbr.rel target = $region3
  $region8: #{resblock_forward.6} parent=0 // loop_exit
    _

</llo_original>
